<compile_context>
chip_gen: v6e
topology: v6e:2x2x1
jax: 0.10.0
libtpu: 0.0.40
codegen_flags: <defaults>
</compile_context>

<pallas_src>
import functools

import jax
import jax.numpy as jnp
from jax.experimental import pallas as pl
from jax.experimental.pallas import tpu as pltpu


# --------------------------------------------------------------------------
# Single fused kernel
# --------------------------------------------------------------------------
def fused_kernel(idx_ref, x0_ref, attn_wqkv_ref, attn_wd_ref, attn_b_ref,
                 mlp_w_ref, mlp_b_ref, out_ref,
                 *, num_layers, n_nodes, n_edges, state_dim, out_rows):
    f32 = jnp.float32
    bf16 = jnp.bfloat16
    N, E, D = n_nodes, n_edges, state_dim

    def mmw(a, w):
        # weight matmul: bf16 MXU inputs, f32 accumulation
        return jnp.dot(a.astype(bf16), w.astype(bf16),
                       preferred_element_type=f32)

    x = x0_ref[...]                                            # (N, D) f32

    # ---- attention stack (static Python loop -> static slab offsets) ------
    for l in range(num_layers):
        b_l = attn_b_ref[l]                                    # (2, 4D) f32
        # fused Q/K/V projection: one (N,D)x(D,3D) matmul
        qkv = mmw(x, attn_wqkv_ref[l]) + b_l[0:1, 0:3 * D]     # (N, 3D)
        q = qkv[:, 0:D]
        k = qkv[:, D:2 * D]
        v = qkv[:, 2 * D:3 * D]
        # NOTE: the module's attention mask is identically zero -> omitted.
        s = jnp.dot(q, k.T, preferred_element_type=f32)        # (N, N) f32
        s = s - jnp.max(s, axis=-1, keepdims=True)
        e = jnp.exp(s)
        p = e * pl.reciprocal(jnp.sum(e, axis=-1, keepdims=True), approx=True)
        ctx = jnp.dot(p, v, preferred_element_type=f32)        # (N, D)
        h = mmw(ctx, attn_wd_ref[l]) + b_l[0:1, 3 * D:4 * D] + x
        # LayerNorm (population variance, eps=1e-5), f32
        mu = jnp.mean(h, axis=-1, keepdims=True)
        var = jnp.mean((h - mu) * (h - mu), axis=-1, keepdims=True)
        y = (h - mu) * jax.lax.rsqrt(var + 1e-5)
        x = y * b_l[1:2, 0:D] + b_l[1:2, D:2 * D]

    # ---- in-kernel gather via one-hot selectors (exact, f32) --------------
    idx = idx_ref[...]                                         # (E, 2) int32
    node_ids = jax.lax.broadcasted_iota(jnp.int32, (E, N), 1)
    si = (node_ids == idx[:, 0:1]).astype(f32)                 # (E, N)
    sj = (node_ids == idx[:, 1:2]).astype(f32)                 # (E, N)
    feats = jnp.concatenate(
        [jnp.dot(si, x, preferred_element_type=f32),           # x[i]
         jnp.dot(sj, x, preferred_element_type=f32)],          # x[j]
        axis=1)                                                # (E, 2D)

    # ---- edge MLP: ResidualLayer x2 + Linear(2D, 4) ------------------------
    mb = mlp_b_ref[...]                                        # (5, 2D) f32
    h = jnp.maximum(mmw(feats, mlp_w_ref[0]) + mb[0:1], 0.0)
    h = jnp.maximum(mmw(h, mlp_w_ref[1]) + mb[1:2], 0.0) + feats
    g = jnp.maximum(mmw(h, mlp_w_ref[2]) + mb[2:3], 0.0)
    g = jnp.maximum(mmw(g, mlp_w_ref[3]) + mb[3:4], 0.0) + h
    logits = (mmw(g, mlp_w_ref[4]) + mb[4:5])[:, 0:4]          # (E, 4)

    # softmax over the 4 joint states (exact division -> normalized marginals)
    m = jnp.max(logits, axis=-1, keepdims=True)
    e = jnp.exp(logits - m)
    probs = e / jnp.sum(e, axis=-1, keepdims=True)             # (E, 4)

    # ---- unary marginals ----------------------------------------------------
    # binary_marginal = probs.reshape(2,2):
    #   sum(1)[1] = p10+p11 = probs[2]+probs[3]   (node i)
    #   sum(0)[1] = p01+p11 = probs[1]+probs[3]   (node j)
    rc0 = probs[:, 2:3] + probs[:, 3:4]                        # (E, 1)
    rc1 = probs[:, 1:2] + probs[:, 3:4]                        # (E, 1)
    contrib = si * rc0 + sj * rc1                              # (E, N)
    num = jnp.sum(contrib, axis=0, keepdims=True)              # (1, N)
    cnt = jnp.sum(si + sj, axis=0, keepdims=True)              # (1, N)
    unary = jnp.where(cnt > 0.0, num / cnt, 0.0)               # (1, N)

    # ---- pack into one lane-dense (out_rows, 128) tile (unmasked stores) ---
    top = jnp.concatenate([probs, jnp.zeros((E, 128 - 4), f32)], axis=1)
    if N < 128:
        urow = jnp.concatenate([unary, jnp.zeros((1, 128 - N), f32)], axis=1)
    else:
        urow = unary
    pad_rows = out_rows - E - 1
    if pad_rows > 0:
        bottom = jnp.concatenate([urow, jnp.zeros((pad_rows, 128), f32)],
                                 axis=0)
    else:
        bottom = urow
    out_ref[...] = jnp.concatenate([top, bottom], axis=0)


# --------------------------------------------------------------------------
# Parameter packing into lane-dense slabs
# --------------------------------------------------------------------------
def pack_params(params):
    a = params["attn"]
    m = params["mlp"]
    L, _, D = a["wq"].shape
    f32 = jnp.float32

    attn_wqkv = jnp.concatenate([a["wq"], a["wk"], a["wv"]],
                                axis=-1).astype(jnp.bfloat16)     # (L, D, 3D)
    attn_wd = a["wd"].astype(jnp.bfloat16)                        # (L, D, D)

    row0 = jnp.concatenate([a["bq"], a["bk"], a["bv"], a["bd"]], axis=-1)
    row1 = jnp.concatenate([a["ln_g"], a["ln_b"],
                            jnp.zeros((L, 1, 2 * D), f32)], axis=-1)
    attn_b = jnp.concatenate([row0, row1], axis=1)                # (L, 2, 4D)

    wo_pad = jnp.concatenate([m["wo"], jnp.zeros((2 * D, 2 * D - 4), f32)],
                             axis=-1)
    mlp_w = jnp.stack([m["w11"], m["w12"], m["w21"], m["w22"], wo_pad],
                      axis=0).astype(jnp.bfloat16)                # (5, 2D, 2D)

    bo_pad = jnp.concatenate([m["bo"], jnp.zeros((1, 2 * D - 4), f32)],
                             axis=-1)
    mlp_b = jnp.concatenate([m["b11"], m["b12"], m["b21"], m["b22"], bo_pad],
                            axis=0)                               # (5, 2D)
    return attn_wqkv, attn_wd, attn_b, mlp_w, mlp_b


# --------------------------------------------------------------------------
# Wrapper: one pallas_call for the whole forward pass
# --------------------------------------------------------------------------
def transformer_inference_forward(params, binary_idx, num_layers=None):
    x0 = params["node_emb"]                       # (N, D)
    N, D = x0.shape
    E = int(binary_idx.shape[0])
    L = params["attn"]["wq"].shape[0]
    if num_layers is None:
        num_layers = L
    assert N <= 128, "unary packing assumes n**2 <= 128"
    out_rows = max(8, ((E + 1 + 7) // 8) * 8)

    idx = binary_idx.astype(jnp.int32)            # (E, 2)
    attn_wqkv, attn_wd, attn_b, mlp_w, mlp_b = pack_params(params)

    vmem = pl.BlockSpec(memory_space=pltpu.MemorySpace.VMEM)
    kernel = functools.partial(fused_kernel, num_layers=num_layers,
                               n_nodes=N, n_edges=E, state_dim=D,
                               out_rows=out_rows)

    packed = pl.pallas_call(
        kernel,
        out_shape=jax.ShapeDtypeStruct((out_rows, 128), jnp.float32),
        in_specs=[vmem] * 7,
        out_specs=vmem,
    )(idx, x0, attn_wqkv, attn_wd, attn_b, mlp_w, mlp_b)

    # cheap XLA glue: unpack the lane-dense tile
    binary_marginals = packed[:E, :4].reshape(E, 2, 2)
    unary_marginals = packed[E, :N]
    return unary_marginals, binary_marginals


# --------------------------------------------------------------------------
# Deterministic parameter construction + pure-JAX (f32) reference
# --------------------------------------------------------------------------
def make_params(key, n, state_dim, num_layers):
    N = n * n
    D = state_dim
    keys = iter(jax.random.split(key, 64))

    def lin(kin, kout):
        kw, kb = jax.random.split(next(keys))
        scale = 1.0 / jnp.sqrt(kin)
        w = jax.random.uniform(kw, (kin, kout), jnp.float32, -scale, scale)
        b = jax.random.uniform(kb, (1, kout), jnp.float32, -scale, scale)
        return w, b

    def stacked_lin(kin, kout):
        ws, bs = zip(*[lin(kin, kout) for _ in range(num_layers)])
        return jnp.stack(ws), jnp.stack(bs)          # (L,kin,kout), (L,1,kout)

    wq, bq = stacked_lin(D, D)
    wk, bk = stacked_lin(D, D)
    wv, bv = stacked_lin(D, D)
    wd, bd = stacked_lin(D, D)
    attn = dict(wq=wq, bq=bq, wk=wk, bk=bk, wv=wv, bv=bv, wd=wd, bd=bd,
                ln_g=jnp.ones((num_layers, 1, D), jnp.float32),
                ln_b=jnp.zeros((num_layers, 1, D), jnp.float32))

    w11, b11 = lin(2 * D, 2 * D)
    w12, b12 = lin(2 * D, 2 * D)
    w21, b21 = lin(2 * D, 2 * D)
    w22, b22 = lin(2 * D, 2 * D)
    wo, bo = lin(2 * D, 4)
    mlp = dict(w11=w11, b11=b11, w12=w12, b12=b12,
               w21=w21, b21=b21, w22=w22, b22=b22, wo=wo, bo=bo)

    node_emb = jax.random.normal(next(keys), (N, D), jnp.float32)
    return dict(node_emb=node_emb, attn=attn, mlp=mlp)


def reference_forward(params, binary_idx, num_layers):
    x = params["node_emb"]
    a = params["attn"]
    for l in range(num_layers):
        q = x @ a["wq"][l] + a["bq"][l]
        k = x @ a["wk"][l] + a["bk"][l]
        v = x @ a["wv"][l] + a["bv"][l]
        s = q @ k.T                                   # module's mask is zero
        p = jax.nn.softmax(s, axis=-1)
        ctx = p @ v
        h = ctx @ a["wd"][l] + a["bd"][l] + x
        mu = h.mean(-1, keepdims=True)
        var = ((h - mu) ** 2).mean(-1, keepdims=True)
        x = (h - mu) / jnp.sqrt(var + 1e-5) * a["ln_g"][l] + a["ln_b"][l]

    feats = jnp.concatenate([x[binary_idx[:, 0]], x[binary_idx[:, 1]]], axis=1)
    m = params["mlp"]
    h = jnp.maximum(feats @ m["w11"] + m["b11"], 0)
    h = jnp.maximum(h @ m["w12"] + m["b12"], 0) + feats
    g = jnp.maximum(h @ m["w21"] + m["b21"], 0)
    g = jnp.maximum(g @ m["w22"] + m["b22"], 0) + h
    logits = g @ m["wo"] + m["bo"]
    probs = jax.nn.softmax(logits, axis=1)
    bm = probs.reshape(-1, 2, 2)

    N = x.shape[0]
    sums = [[] for _ in range(N)]
    for kk, (i, j) in enumerate(binary_idx.tolist()):
        sums[i].append(bm[kk].sum(1))
        sums[j].append(bm[kk].sum(0))
    unary = jnp.stack([jnp.stack(u, 0).mean(0)[1] for u in sums])
    return unary, bm


def grid_binary_idx(n):
    N = n * n
    edges = []
    for i in range(N):
        if (i + 1) % n != 0:
            edges.append((i, i + 1))     # right neighbor
        if i + n < N:
            edges.append((i, i + n))     # down neighbor
    return jnp.array(edges, dtype=jnp.int32)


if __name__ == "__main__":
    n = 4              # grid side -> N = 16 nodes
    state_dim = 32
    num_layers = 2     # exercise the in-kernel layer loop

    key = jax.random.PRNGKey(0)
    params = make_params(key, n, state_dim, num_layers)
    binary_idx = grid_binary_idx(n)                 # (E, 2) = (24, 2)
    N = n * n
    E = int(binary_idx.shape[0])

    unary, binary = transformer_inference_forward(params, binary_idx,
                                                  num_layers=num_layers)
    jax.block_until_ready((unary, binary))

    unary_ref, binary_ref = reference_forward(params, binary_idx, num_layers)
    assert unary.shape == (N,) and binary.shape == (E, 2, 2)

    # strict check: exact-division final softmax -> marginals sum to 1
    assert jnp.allclose(binary.sum(axis=(1, 2)), 1.0, atol=1e-5)

    # vs. pure-f32 reference: the kernel uses bf16 MXU inputs for the weight
    # matmuls and pl.reciprocal(approx=True) in the attention softmax, which
    # introduces ~1e-2-level deviation after 2 layers + MLP; 4e-2 tolerance
    # still catches any structural/indexing error (those produce O(0.1+) gaps).
    assert jnp.allclose(unary, unary_ref, atol=4e-2, rtol=4e-2)
    assert jnp.allclose(binary, binary_ref, atol=4e-2, rtol=4e-2)

    print("KERNEL_OK")
</pallas_src>

<mosaic_0001>
module attributes {stable_mosaic.version = 11 : i64} {
  func.func @fused_kernel(%arg0: memref<24x2xi32, #tpu.memory_space<vmem>>, %arg1: memref<16x32xf32, #tpu.memory_space<vmem>>, %arg2: memref<2x32x96xbf16, #tpu.memory_space<vmem>>, %arg3: memref<2x32x32xbf16, #tpu.memory_space<vmem>>, %arg4: memref<2x2x128xf32, #tpu.memory_space<vmem>>, %arg5: memref<5x64x64xbf16, #tpu.memory_space<vmem>>, %arg6: memref<5x64xf32, #tpu.memory_space<vmem>>, %arg7: memref<32x128xf32, #tpu.memory_space<vmem>>) attributes {dimension_semantics = [], scalar_prefetch = 0 : i64, scratch_operands = 0 : i64, tpu.core_type = #tpu.core_type<tc>} {
    %c0 = arith.constant 0 : index
    %c0_0 = arith.constant 0 : index
    %0 = vector.load %arg1[%c0, %c0_0] : memref<16x32xf32, #tpu.memory_space<vmem>>, vector<16x32xf32>
    %c0_1 = arith.constant 0 : index
    %c0_2 = arith.constant 0 : index
    %c0_3 = arith.constant 0 : index
    %1 = vector.load %arg4[%c0_1, %c0_2, %c0_3] : memref<2x2x128xf32, #tpu.memory_space<vmem>>, vector<1x2x128xf32>
    %2 = vector.shape_cast %1 : vector<1x2x128xf32> to vector<2x128xf32>
    %c0_4 = arith.constant 0 : index
    %c0_5 = arith.constant 0 : index
    %c0_6 = arith.constant 0 : index
    %3 = vector.load %arg2[%c0_4, %c0_5, %c0_6] : memref<2x32x96xbf16, #tpu.memory_space<vmem>>, vector<1x32x96xbf16>
    %4 = vector.shape_cast %3 : vector<1x32x96xbf16> to vector<32x96xbf16>
    %5 = arith.truncf %0 : vector<16x32xf32> to vector<16x32xbf16>
    %cst = arith.constant dense<0.000000e+00> : vector<16x96xf32>
    %6 = tpu.matmul %5, %4, %cst {dimension_numbers = #tpu.dot_dimension_numbers<[1], [0], [0], [1], [0, 0, 1, 1], [], []>} : vector<16x32xbf16>, vector<32x96xbf16>, vector<16x96xf32> -> vector<16x96xf32>
    %7 = vector.extract_strided_slice %2 {offsets = [0, 0], sizes = [1, 96], strides = [1, 1]} : vector<2x128xf32> to vector<1x96xf32>
    %8 = vector.broadcast %7 : vector<1x96xf32> to vector<16x96xf32>
    %9 = arith.addf %6, %8 : vector<16x96xf32>
    %10 = vector.extract_strided_slice %9 {offsets = [0, 0], sizes = [16, 32], strides = [1, 1]} : vector<16x96xf32> to vector<16x32xf32>
    %11 = vector.extract_strided_slice %9 {offsets = [0, 32], sizes = [16, 32], strides = [1, 1]} : vector<16x96xf32> to vector<16x32xf32>
    %12 = vector.extract_strided_slice %9 {offsets = [0, 64], sizes = [16, 32], strides = [1, 1]} : vector<16x96xf32> to vector<16x32xf32>
    %13 = tpu.transpose %11, [1, 0] : vector<16x32xf32> -> vector<32x16xf32>
    %cst_7 = arith.constant dense<0.000000e+00> : vector<16x16xf32>
    %14 = tpu.matmul %10, %13, %cst_7 {dimension_numbers = #tpu.dot_dimension_numbers<[1], [0], [0], [1], [0, 0, 1, 1], [], []>} : vector<16x32xf32>, vector<32x16xf32>, vector<16x16xf32> -> vector<16x16xf32>
    %cst_8 = arith.constant dense<0xFF800000> : vector<16xf32>
    %15 = vector.multi_reduction <maximumf>, %14, %cst_8 [1] : vector<16x16xf32> to vector<16xf32>
    %16 = vector.shape_cast %15 : vector<16xf32> to vector<16x1xf32>
    %17 = vector.broadcast %16 : vector<16x1xf32> to vector<16x16xf32>
    %18 = arith.subf %14, %17 : vector<16x16xf32>
    %19 = math.exp %18 : vector<16x16xf32>
    %cst_9 = arith.constant dense<0.000000e+00> : vector<16xf32>
    %20 = vector.multi_reduction <add>, %19, %cst_9 [1] : vector<16x16xf32> to vector<16xf32>
    %21 = vector.shape_cast %20 : vector<16xf32> to vector<16x1xf32>
    %22 = tpu.reciprocal %21 {approx = true} : vector<16x1xf32> -> vector<16x1xf32>
    %23 = vector.broadcast %22 : vector<16x1xf32> to vector<16x16xf32>
    %24 = arith.mulf %19, %23 : vector<16x16xf32>
    %cst_10 = arith.constant dense<0.000000e+00> : vector<16x32xf32>
    %25 = tpu.matmul %24, %12, %cst_10 {dimension_numbers = #tpu.dot_dimension_numbers<[1], [0], [0], [1], [0, 0, 1, 1], [], []>} : vector<16x16xf32>, vector<16x32xf32>, vector<16x32xf32> -> vector<16x32xf32>
    %c0_11 = arith.constant 0 : index
    %c0_12 = arith.constant 0 : index
    %c0_13 = arith.constant 0 : index
    %26 = vector.load %arg3[%c0_11, %c0_12, %c0_13] : memref<2x32x32xbf16, #tpu.memory_space<vmem>>, vector<1x32x32xbf16>
    %27 = vector.shape_cast %26 : vector<1x32x32xbf16> to vector<32x32xbf16>
    %28 = arith.truncf %25 : vector<16x32xf32> to vector<16x32xbf16>
    %cst_14 = arith.constant dense<0.000000e+00> : vector<16x32xf32>
    %29 = tpu.matmul %28, %27, %cst_14 {dimension_numbers = #tpu.dot_dimension_numbers<[1], [0], [0], [1], [0, 0, 1, 1], [], []>} : vector<16x32xbf16>, vector<32x32xbf16>, vector<16x32xf32> -> vector<16x32xf32>
    %30 = vector.extract_strided_slice %2 {offsets = [0, 96], sizes = [1, 32], strides = [1, 1]} : vector<2x128xf32> to vector<1x32xf32>
    %31 = vector.broadcast %30 : vector<1x32xf32> to vector<16x32xf32>
    %32 = arith.addf %29, %31 : vector<16x32xf32>
    %33 = arith.addf %32, %0 : vector<16x32xf32>
    %cst_15 = arith.constant dense<0.000000e+00> : vector<16xf32>
    %34 = vector.multi_reduction <add>, %33, %cst_15 [1] : vector<16x32xf32> to vector<16xf32>
    %35 = vector.shape_cast %34 : vector<16xf32> to vector<16x1xf32>
    %cst_16 = arith.constant 3.200000e+01 : f32
    %36 = vector.broadcast %cst_16 : f32 to vector<16x1xf32>
    %37 = arith.divf %35, %36 : vector<16x1xf32>
    %38 = vector.broadcast %37 : vector<16x1xf32> to vector<16x32xf32>
    %39 = arith.subf %33, %38 : vector<16x32xf32>
    %40 = vector.broadcast %37 : vector<16x1xf32> to vector<16x32xf32>
    %41 = arith.subf %33, %40 : vector<16x32xf32>
    %42 = arith.mulf %39, %41 : vector<16x32xf32>
    %cst_17 = arith.constant dense<0.000000e+00> : vector<16xf32>
    %43 = vector.multi_reduction <add>, %42, %cst_17 [1] : vector<16x32xf32> to vector<16xf32>
    %44 = vector.shape_cast %43 : vector<16xf32> to vector<16x1xf32>
    %cst_18 = arith.constant 3.200000e+01 : f32
    %45 = vector.broadcast %cst_18 : f32 to vector<16x1xf32>
    %46 = arith.divf %44, %45 : vector<16x1xf32>
    %47 = vector.broadcast %37 : vector<16x1xf32> to vector<16x32xf32>
    %48 = arith.subf %33, %47 : vector<16x32xf32>
    %cst_19 = arith.constant 9.99999974E-6 : f32
    %49 = vector.broadcast %cst_19 : f32 to vector<16x1xf32>
    %50 = arith.addf %46, %49 : vector<16x1xf32>
    %51 = math.rsqrt %50 : vector<16x1xf32>
    %52 = vector.broadcast %51 : vector<16x1xf32> to vector<16x32xf32>
    %53 = arith.mulf %48, %52 : vector<16x32xf32>
    %54 = vector.extract_strided_slice %2 {offsets = [1, 0], sizes = [1, 32], strides = [1, 1]} : vector<2x128xf32> to vector<1x32xf32>
    %55 = vector.broadcast %54 : vector<1x32xf32> to vector<16x32xf32>
    %56 = arith.mulf %53, %55 : vector<16x32xf32>
    %57 = vector.extract_strided_slice %2 {offsets = [1, 32], sizes = [1, 32], strides = [1, 1]} : vector<2x128xf32> to vector<1x32xf32>
    %58 = vector.broadcast %57 : vector<1x32xf32> to vector<16x32xf32>
    %59 = arith.addf %56, %58 : vector<16x32xf32>
    %c1 = arith.constant 1 : index
    %c0_20 = arith.constant 0 : index
    %c0_21 = arith.constant 0 : index
    %60 = vector.load %arg4[%c1, %c0_20, %c0_21] : memref<2x2x128xf32, #tpu.memory_space<vmem>>, vector<1x2x128xf32>
    %61 = vector.shape_cast %60 : vector<1x2x128xf32> to vector<2x128xf32>
    %c1_22 = arith.constant 1 : index
    %c0_23 = arith.constant 0 : index
    %c0_24 = arith.constant 0 : index
    %62 = vector.load %arg2[%c1_22, %c0_23, %c0_24] : memref<2x32x96xbf16, #tpu.memory_space<vmem>>, vector<1x32x96xbf16>
    %63 = vector.shape_cast %62 : vector<1x32x96xbf16> to vector<32x96xbf16>
    %64 = arith.truncf %59 : vector<16x32xf32> to vector<16x32xbf16>
    %cst_25 = arith.constant dense<0.000000e+00> : vector<16x96xf32>
    %65 = tpu.matmul %64, %63, %cst_25 {dimension_numbers = #tpu.dot_dimension_numbers<[1], [0], [0], [1], [0, 0, 1, 1], [], []>} : vector<16x32xbf16>, vector<32x96xbf16>, vector<16x96xf32> -> vector<16x96xf32>
    %66 = vector.extract_strided_slice %61 {offsets = [0, 0], sizes = [1, 96], strides = [1, 1]} : vector<2x128xf32> to vector<1x96xf32>
    %67 = vector.broadcast %66 : vector<1x96xf32> to vector<16x96xf32>
    %68 = arith.addf %65, %67 : vector<16x96xf32>
    %69 = vector.extract_strided_slice %68 {offsets = [0, 0], sizes = [16, 32], strides = [1, 1]} : vector<16x96xf32> to vector<16x32xf32>
    %70 = vector.extract_strided_slice %68 {offsets = [0, 32], sizes = [16, 32], strides = [1, 1]} : vector<16x96xf32> to vector<16x32xf32>
    %71 = vector.extract_strided_slice %68 {offsets = [0, 64], sizes = [16, 32], strides = [1, 1]} : vector<16x96xf32> to vector<16x32xf32>
    %72 = tpu.transpose %70, [1, 0] : vector<16x32xf32> -> vector<32x16xf32>
    %cst_26 = arith.constant dense<0.000000e+00> : vector<16x16xf32>
    %73 = tpu.matmul %69, %72, %cst_26 {dimension_numbers = #tpu.dot_dimension_numbers<[1], [0], [0], [1], [0, 0, 1, 1], [], []>} : vector<16x32xf32>, vector<32x16xf32>, vector<16x16xf32> -> vector<16x16xf32>
    %cst_27 = arith.constant dense<0xFF800000> : vector<16xf32>
    %74 = vector.multi_reduction <maximumf>, %73, %cst_27 [1] : vector<16x16xf32> to vector<16xf32>
    %75 = vector.shape_cast %74 : vector<16xf32> to vector<16x1xf32>
    %76 = vector.broadcast %75 : vector<16x1xf32> to vector<16x16xf32>
    %77 = arith.subf %73, %76 : vector<16x16xf32>
    %78 = math.exp %77 : vector<16x16xf32>
    %cst_28 = arith.constant dense<0.000000e+00> : vector<16xf32>
    %79 = vector.multi_reduction <add>, %78, %cst_28 [1] : vector<16x16xf32> to vector<16xf32>
    %80 = vector.shape_cast %79 : vector<16xf32> to vector<16x1xf32>
    %81 = tpu.reciprocal %80 {approx = true} : vector<16x1xf32> -> vector<16x1xf32>
    %82 = vector.broadcast %81 : vector<16x1xf32> to vector<16x16xf32>
    %83 = arith.mulf %78, %82 : vector<16x16xf32>
    %cst_29 = arith.constant dense<0.000000e+00> : vector<16x32xf32>
    %84 = tpu.matmul %83, %71, %cst_29 {dimension_numbers = #tpu.dot_dimension_numbers<[1], [0], [0], [1], [0, 0, 1, 1], [], []>} : vector<16x16xf32>, vector<16x32xf32>, vector<16x32xf32> -> vector<16x32xf32>
    %c1_30 = arith.constant 1 : index
    %c0_31 = arith.constant 0 : index
    %c0_32 = arith.constant 0 : index
    %85 = vector.load %arg3[%c1_30, %c0_31, %c0_32] : memref<2x32x32xbf16, #tpu.memory_space<vmem>>, vector<1x32x32xbf16>
    %86 = vector.shape_cast %85 : vector<1x32x32xbf16> to vector<32x32xbf16>
    %87 = arith.truncf %84 : vector<16x32xf32> to vector<16x32xbf16>
    %cst_33 = arith.constant dense<0.000000e+00> : vector<16x32xf32>
    %88 = tpu.matmul %87, %86, %cst_33 {dimension_numbers = #tpu.dot_dimension_numbers<[1], [0], [0], [1], [0, 0, 1, 1], [], []>} : vector<16x32xbf16>, vector<32x32xbf16>, vector<16x32xf32> -> vector<16x32xf32>
    %89 = vector.extract_strided_slice %61 {offsets = [0, 96], sizes = [1, 32], strides = [1, 1]} : vector<2x128xf32> to vector<1x32xf32>
    %90 = vector.broadcast %89 : vector<1x32xf32> to vector<16x32xf32>
    %91 = arith.addf %88, %90 : vector<16x32xf32>
    %92 = arith.addf %91, %59 : vector<16x32xf32>
    %cst_34 = arith.constant dense<0.000000e+00> : vector<16xf32>
    %93 = vector.multi_reduction <add>, %92, %cst_34 [1] : vector<16x32xf32> to vector<16xf32>
    %94 = vector.shape_cast %93 : vector<16xf32> to vector<16x1xf32>
    %cst_35 = arith.constant 3.200000e+01 : f32
    %95 = vector.broadcast %cst_35 : f32 to vector<16x1xf32>
    %96 = arith.divf %94, %95 : vector<16x1xf32>
    %97 = vector.broadcast %96 : vector<16x1xf32> to vector<16x32xf32>
    %98 = arith.subf %92, %97 : vector<16x32xf32>
    %99 = vector.broadcast %96 : vector<16x1xf32> to vector<16x32xf32>
    %100 = arith.subf %92, %99 : vector<16x32xf32>
    %101 = arith.mulf %98, %100 : vector<16x32xf32>
    %cst_36 = arith.constant dense<0.000000e+00> : vector<16xf32>
    %102 = vector.multi_reduction <add>, %101, %cst_36 [1] : vector<16x32xf32> to vector<16xf32>
    %103 = vector.shape_cast %102 : vector<16xf32> to vector<16x1xf32>
    %cst_37 = arith.constant 3.200000e+01 : f32
    %104 = vector.broadcast %cst_37 : f32 to vector<16x1xf32>
    %105 = arith.divf %103, %104 : vector<16x1xf32>
    %106 = vector.broadcast %96 : vector<16x1xf32> to vector<16x32xf32>
    %107 = arith.subf %92, %106 : vector<16x32xf32>
    %cst_38 = arith.constant 9.99999974E-6 : f32
    %108 = vector.broadcast %cst_38 : f32 to vector<16x1xf32>
    %109 = arith.addf %105, %108 : vector<16x1xf32>
    %110 = math.rsqrt %109 : vector<16x1xf32>
    %111 = vector.broadcast %110 : vector<16x1xf32> to vector<16x32xf32>
    %112 = arith.mulf %107, %111 : vector<16x32xf32>
    %113 = vector.extract_strided_slice %61 {offsets = [1, 0], sizes = [1, 32], strides = [1, 1]} : vector<2x128xf32> to vector<1x32xf32>
    %114 = vector.broadcast %113 : vector<1x32xf32> to vector<16x32xf32>
    %115 = arith.mulf %112, %114 : vector<16x32xf32>
    %116 = vector.extract_strided_slice %61 {offsets = [1, 32], sizes = [1, 32], strides = [1, 1]} : vector<2x128xf32> to vector<1x32xf32>
    %117 = vector.broadcast %116 : vector<1x32xf32> to vector<16x32xf32>
    %118 = arith.addf %115, %117 : vector<16x32xf32>
    %c0_39 = arith.constant 0 : index
    %c0_40 = arith.constant 0 : index
    %119 = vector.load %arg0[%c0_39, %c0_40] : memref<24x2xi32, #tpu.memory_space<vmem>>, vector<24x2xi32>
    %120 = tpu.iota {dimensions = array<i32: 1>} : vector<24x16xi32>
    %121 = vector.extract_strided_slice %119 {offsets = [0, 0], sizes = [24, 1], strides = [1, 1]} : vector<24x2xi32> to vector<24x1xi32>
    %122 = vector.broadcast %121 : vector<24x1xi32> to vector<24x16xi32>
    %123 = arith.cmpi eq, %120, %122 : vector<24x16xi32>
    %124 = arith.extui %123 : vector<24x16xi1> to vector<24x16xi32>
    %125 = arith.sitofp %124 : vector<24x16xi32> to vector<24x16xf32>
    %126 = vector.extract_strided_slice %119 {offsets = [0, 1], sizes = [24, 1], strides = [1, 1]} : vector<24x2xi32> to vector<24x1xi32>
    %127 = vector.broadcast %126 : vector<24x1xi32> to vector<24x16xi32>
    %128 = arith.cmpi eq, %120, %127 : vector<24x16xi32>
    %129 = arith.extui %128 : vector<24x16xi1> to vector<24x16xi32>
    %130 = arith.sitofp %129 : vector<24x16xi32> to vector<24x16xf32>
    %cst_41 = arith.constant dense<0.000000e+00> : vector<24x32xf32>
    %131 = tpu.matmul %125, %118, %cst_41 {dimension_numbers = #tpu.dot_dimension_numbers<[1], [0], [0], [1], [0, 0, 1, 1], [], []>} : vector<24x16xf32>, vector<16x32xf32>, vector<24x32xf32> -> vector<24x32xf32>
    %cst_42 = arith.constant dense<0.000000e+00> : vector<24x32xf32>
    %132 = tpu.matmul %130, %118, %cst_42 {dimension_numbers = #tpu.dot_dimension_numbers<[1], [0], [0], [1], [0, 0, 1, 1], [], []>} : vector<24x16xf32>, vector<16x32xf32>, vector<24x32xf32> -> vector<24x32xf32>
    %133 = tpu.concatenate %131, %132 in 1 : vector<24x32xf32>, vector<24x32xf32> -> vector<24x64xf32>
    %c0_43 = arith.constant 0 : index
    %c0_44 = arith.constant 0 : index
    %134 = vector.load %arg6[%c0_43, %c0_44] : memref<5x64xf32, #tpu.memory_space<vmem>>, vector<5x64xf32>
    %c0_45 = arith.constant 0 : index
    %c0_46 = arith.constant 0 : index
    %c0_47 = arith.constant 0 : index
    %135 = vector.load %arg5[%c0_45, %c0_46, %c0_47] : memref<5x64x64xbf16, #tpu.memory_space<vmem>>, vector<1x64x64xbf16>
    %136 = vector.shape_cast %135 : vector<1x64x64xbf16> to vector<64x64xbf16>
    %137 = arith.truncf %133 : vector<24x64xf32> to vector<24x64xbf16>
    %cst_48 = arith.constant dense<0.000000e+00> : vector<24x64xf32>
    %138 = tpu.matmul %137, %136, %cst_48 {dimension_numbers = #tpu.dot_dimension_numbers<[1], [0], [0], [1], [0, 0, 1, 1], [], []>} : vector<24x64xbf16>, vector<64x64xbf16>, vector<24x64xf32> -> vector<24x64xf32>
    %139 = vector.extract_strided_slice %134 {offsets = [0, 0], sizes = [1, 64], strides = [1, 1]} : vector<5x64xf32> to vector<1x64xf32>
    %140 = vector.broadcast %139 : vector<1x64xf32> to vector<24x64xf32>
    %141 = arith.addf %138, %140 : vector<24x64xf32>
    %cst_49 = arith.constant 0.000000e+00 : f32
    %142 = vector.broadcast %cst_49 : f32 to vector<24x64xf32>
    %143 = arith.maximumf %141, %142 : vector<24x64xf32>
    %c1_50 = arith.constant 1 : index
    %c0_51 = arith.constant 0 : index
    %c0_52 = arith.constant 0 : index
    %144 = vector.load %arg5[%c1_50, %c0_51, %c0_52] : memref<5x64x64xbf16, #tpu.memory_space<vmem>>, vector<1x64x64xbf16>
    %145 = vector.shape_cast %144 : vector<1x64x64xbf16> to vector<64x64xbf16>
    %146 = arith.truncf %143 : vector<24x64xf32> to vector<24x64xbf16>
    %cst_53 = arith.constant dense<0.000000e+00> : vector<24x64xf32>
    %147 = tpu.matmul %146, %145, %cst_53 {dimension_numbers = #tpu.dot_dimension_numbers<[1], [0], [0], [1], [0, 0, 1, 1], [], []>} : vector<24x64xbf16>, vector<64x64xbf16>, vector<24x64xf32> -> vector<24x64xf32>
    %148 = vector.extract_strided_slice %134 {offsets = [1, 0], sizes = [1, 64], strides = [1, 1]} : vector<5x64xf32> to vector<1x64xf32>
    %149 = vector.broadcast %148 : vector<1x64xf32> to vector<24x64xf32>
    %150 = arith.addf %147, %149 : vector<24x64xf32>
    %cst_54 = arith.constant 0.000000e+00 : f32
    %151 = vector.broadcast %cst_54 : f32 to vector<24x64xf32>
    %152 = arith.maximumf %150, %151 : vector<24x64xf32>
    %153 = arith.addf %152, %133 : vector<24x64xf32>
    %c2 = arith.constant 2 : index
    %c0_55 = arith.constant 0 : index
    %c0_56 = arith.constant 0 : index
    %154 = vector.load %arg5[%c2, %c0_55, %c0_56] : memref<5x64x64xbf16, #tpu.memory_space<vmem>>, vector<1x64x64xbf16>
    %155 = vector.shape_cast %154 : vector<1x64x64xbf16> to vector<64x64xbf16>
    %156 = arith.truncf %153 : vector<24x64xf32> to vector<24x64xbf16>
    %cst_57 = arith.constant dense<0.000000e+00> : vector<24x64xf32>
    %157 = tpu.matmul %156, %155, %cst_57 {dimension_numbers = #tpu.dot_dimension_numbers<[1], [0], [0], [1], [0, 0, 1, 1], [], []>} : vector<24x64xbf16>, vector<64x64xbf16>, vector<24x64xf32> -> vector<24x64xf32>
    %158 = vector.extract_strided_slice %134 {offsets = [2, 0], sizes = [1, 64], strides = [1, 1]} : vector<5x64xf32> to vector<1x64xf32>
    %159 = vector.broadcast %158 : vector<1x64xf32> to vector<24x64xf32>
    %160 = arith.addf %157, %159 : vector<24x64xf32>
    %cst_58 = arith.constant 0.000000e+00 : f32
    %161 = vector.broadcast %cst_58 : f32 to vector<24x64xf32>
    %162 = arith.maximumf %160, %161 : vector<24x64xf32>
    %c3 = arith.constant 3 : index
    %c0_59 = arith.constant 0 : index
    %c0_60 = arith.constant 0 : index
    %163 = vector.load %arg5[%c3, %c0_59, %c0_60] : memref<5x64x64xbf16, #tpu.memory_space<vmem>>, vector<1x64x64xbf16>
    %164 = vector.shape_cast %163 : vector<1x64x64xbf16> to vector<64x64xbf16>
    %165 = arith.truncf %162 : vector<24x64xf32> to vector<24x64xbf16>
    %cst_61 = arith.constant dense<0.000000e+00> : vector<24x64xf32>
    %166 = tpu.matmul %165, %164, %cst_61 {dimension_numbers = #tpu.dot_dimension_numbers<[1], [0], [0], [1], [0, 0, 1, 1], [], []>} : vector<24x64xbf16>, vector<64x64xbf16>, vector<24x64xf32> -> vector<24x64xf32>
    %167 = vector.extract_strided_slice %134 {offsets = [3, 0], sizes = [1, 64], strides = [1, 1]} : vector<5x64xf32> to vector<1x64xf32>
    %168 = vector.broadcast %167 : vector<1x64xf32> to vector<24x64xf32>
    %169 = arith.addf %166, %168 : vector<24x64xf32>
    %cst_62 = arith.constant 0.000000e+00 : f32
    %170 = vector.broadcast %cst_62 : f32 to vector<24x64xf32>
    %171 = arith.maximumf %169, %170 : vector<24x64xf32>
    %172 = arith.addf %171, %153 : vector<24x64xf32>
    %c4 = arith.constant 4 : index
    %c0_63 = arith.constant 0 : index
    %c0_64 = arith.constant 0 : index
    %173 = vector.load %arg5[%c4, %c0_63, %c0_64] : memref<5x64x64xbf16, #tpu.memory_space<vmem>>, vector<1x64x64xbf16>
    %174 = vector.shape_cast %173 : vector<1x64x64xbf16> to vector<64x64xbf16>
    %175 = arith.truncf %172 : vector<24x64xf32> to vector<24x64xbf16>
    %cst_65 = arith.constant dense<0.000000e+00> : vector<24x64xf32>
    %176 = tpu.matmul %175, %174, %cst_65 {dimension_numbers = #tpu.dot_dimension_numbers<[1], [0], [0], [1], [0, 0, 1, 1], [], []>} : vector<24x64xbf16>, vector<64x64xbf16>, vector<24x64xf32> -> vector<24x64xf32>
    %177 = vector.extract_strided_slice %134 {offsets = [4, 0], sizes = [1, 64], strides = [1, 1]} : vector<5x64xf32> to vector<1x64xf32>
    %178 = vector.broadcast %177 : vector<1x64xf32> to vector<24x64xf32>
    %179 = arith.addf %176, %178 : vector<24x64xf32>
    %180 = vector.extract_strided_slice %179 {offsets = [0, 0], sizes = [24, 4], strides = [1, 1]} : vector<24x64xf32> to vector<24x4xf32>
    %cst_66 = arith.constant dense<0xFF800000> : vector<24xf32>
    %181 = vector.multi_reduction <maximumf>, %180, %cst_66 [1] : vector<24x4xf32> to vector<24xf32>
    %182 = vector.shape_cast %181 : vector<24xf32> to vector<24x1xf32>
    %183 = vector.broadcast %182 : vector<24x1xf32> to vector<24x4xf32>
    %184 = arith.subf %180, %183 : vector<24x4xf32>
    %185 = math.exp %184 : vector<24x4xf32>
    %cst_67 = arith.constant dense<0.000000e+00> : vector<24xf32>
    %186 = vector.multi_reduction <add>, %185, %cst_67 [1] : vector<24x4xf32> to vector<24xf32>
    %187 = vector.shape_cast %186 : vector<24xf32> to vector<24x1xf32>
    %188 = vector.broadcast %187 : vector<24x1xf32> to vector<24x4xf32>
    %189 = arith.divf %185, %188 : vector<24x4xf32>
    %190 = vector.extract_strided_slice %189 {offsets = [0, 2], sizes = [24, 1], strides = [1, 1]} : vector<24x4xf32> to vector<24x1xf32>
    %191 = vector.extract_strided_slice %189 {offsets = [0, 3], sizes = [24, 1], strides = [1, 1]} : vector<24x4xf32> to vector<24x1xf32>
    %192 = arith.addf %190, %191 : vector<24x1xf32>
    %193 = vector.extract_strided_slice %189 {offsets = [0, 1], sizes = [24, 1], strides = [1, 1]} : vector<24x4xf32> to vector<24x1xf32>
    %194 = vector.extract_strided_slice %189 {offsets = [0, 3], sizes = [24, 1], strides = [1, 1]} : vector<24x4xf32> to vector<24x1xf32>
    %195 = arith.addf %193, %194 : vector<24x1xf32>
    %196 = vector.broadcast %192 : vector<24x1xf32> to vector<24x16xf32>
    %197 = arith.mulf %125, %196 : vector<24x16xf32>
    %198 = vector.broadcast %195 : vector<24x1xf32> to vector<24x16xf32>
    %199 = arith.mulf %130, %198 : vector<24x16xf32>
    %200 = arith.addf %197, %199 : vector<24x16xf32>
    %cst_68 = arith.constant dense<0.000000e+00> : vector<16xf32>
    %201 = vector.multi_reduction <add>, %200, %cst_68 [0] : vector<24x16xf32> to vector<16xf32>
    %202 = vector.shape_cast %201 : vector<16xf32> to vector<1x16xf32>
    %203 = arith.addf %125, %130 : vector<24x16xf32>
    %cst_69 = arith.constant dense<0.000000e+00> : vector<16xf32>
    %204 = vector.multi_reduction <add>, %203, %cst_69 [0] : vector<24x16xf32> to vector<16xf32>
    %205 = vector.shape_cast %204 : vector<16xf32> to vector<1x16xf32>
    %cst_70 = arith.constant 0.000000e+00 : f32
    %206 = vector.broadcast %cst_70 : f32 to vector<1x16xf32>
    %207 = arith.cmpf ogt, %205, %206 : vector<1x16xf32>
    %208 = arith.divf %202, %205 : vector<1x16xf32>
    %cst_71 = arith.constant 0.000000e+00 : f32
    %209 = vector.broadcast %cst_71 : f32 to vector<1x16xf32>
    %210 = arith.select %207, %208, %209 : vector<1x16xi1>, vector<1x16xf32>
    %cst_72 = arith.constant 0.000000e+00 : f32
    %211 = vector.broadcast %cst_72 : f32 to vector<24x124xf32>
    %212 = tpu.concatenate %189, %211 in 1 : vector<24x4xf32>, vector<24x124xf32> -> vector<24x128xf32>
    %cst_73 = arith.constant 0.000000e+00 : f32
    %213 = vector.broadcast %cst_73 : f32 to vector<1x112xf32>
    %214 = tpu.concatenate %210, %213 in 1 : vector<1x16xf32>, vector<1x112xf32> -> vector<1x128xf32>
    %cst_74 = arith.constant 0.000000e+00 : f32
    %215 = vector.broadcast %cst_74 : f32 to vector<7x128xf32>
    %216 = tpu.concatenate %214, %215 in 0 : vector<1x128xf32>, vector<7x128xf32> -> vector<8x128xf32>
    %217 = tpu.concatenate %212, %216 in 0 : vector<24x128xf32>, vector<8x128xf32> -> vector<32x128xf32>
    %c0_75 = arith.constant 0 : index
    %c0_76 = arith.constant 0 : index
    %218 = vector.load %arg7[%c0_75, %c0_76] : memref<32x128xf32, #tpu.memory_space<vmem>>, vector<32x128xf32>
    tpu.vector_store %arg7[%c0_75, %c0_76], %217 {strides = array<i32>} : memref<32x128xf32, #tpu.memory_space<vmem>>, vector<32x128xf32>,
    return
  }
}

</mosaic_0001>

<llo_original>
// kernel: tpu_custom_call.1
$region0: #{tpu_custom_call.1}
  #allocation0 [shape = 'u32[]', space=smem, size = 0x4, offset = 0x4, fixed_abs, tag = 'smem constant byte address 0x4 - core index']
  #allocation1 [shape = 'u32[144,128]{1,0:T(1,128)}', space=vmem, size = 0x12000, scoped, tag = 'internal scratch']
  %s0 = inlined_call_operand.vmem [shape: s32[24,2], index: 0, kind: input, shape index: {}]
  %s1 = inlined_call_operand.vmem [shape: f32[16,32], index: 1, kind: input, shape index: {}]
  %s2 = inlined_call_operand.hbm [shape: bf16[2,32,96], index: 2, kind: input, shape index: {}]
  %s3 = inlined_call_operand.hbm [shape: bf16[2,32,32], index: 3, kind: input, shape index: {}]
  %s4 = inlined_call_operand.vmem [shape: f32[2,2,128], index: 4, kind: input, shape index: {}]
  %s5 = inlined_call_operand.hbm [shape: bf16[5,64,64], index: 5, kind: input, shape index: {}]
  %s6 = inlined_call_operand.vmem [shape: f32[5,64], index: 6, kind: input, shape index: {}]
  %s7 = inlined_call_operand.hbm [shape: f32[32,128], index: 7, kind: output, shape index: {}]
  %s8 = sld [smem:[#allocation0]]
  $region50: #{tpu_custom_call.1} parent=0
    _
  %s10 = ssub.s32 1, %s8
  %s11 = scalar_select 0, %s10, %s8
  $region1: #{tpu_custom_call.1} parent=0
    #allocation2 [shape = 'u8[16384]{0}', space=vmem, size = 0x4000, scoped, tag = 'input window, operand 2, single buffered']
    #allocation3 [shape = 's32[1]{0}', space=sflag, size = 0x4, scoped, tag = 'scoped memory for tpu_custom_call.1']
    #allocation4 [shape = 's32[1]{0}', space=sflag, size = 0x4, scoped, tag = 'scoped memory for tpu_custom_call.1']
    #allocation5 [shape = 'u8[16384]{0}', space=vmem, size = 0x4000, scoped, tag = 'input window, operand 3, single buffered']
    #allocation6 [shape = 's32[1]{0}', space=sflag, size = 0x4, scoped, tag = 'scoped memory for tpu_custom_call.1']
    #allocation7 [shape = 'u8[81920]{0}', space=vmem, size = 0x14000, scoped, tag = 'input window, operand 5, single buffered']
    #allocation8 [shape = 'u8[16384]{0}', space=vmem, size = 0x4000, scoped, tag = 'output window, operand 0, single buffered']
    %12 = vsyncpa [#allocation3], 0
    %13 = vsyncpa [#allocation6], 0
    %14 = vsyncpa [#allocation4], 0
    // Predicated region
    $region2: #{tpu_custom_call.1} parent=1 // pred_check
      _
    $region3: #{tpu_custom_call.1} parent=1 // pred_check_branch
      %16 = sbr.rel (0) target = $region5
    $region4: #{tpu_custom_call.1} parent=1 // pred_region
      _
    $region5: #{tpu_custom_call.1} parent=1 // pred_fallthru
      _
    // Predicated region
    $region6: #{tpu_custom_call.1} parent=1 // pred_check
      _
    $region7: #{tpu_custom_call.1} parent=1 // pred_check_branch
      %18 = sbr.rel (0) target = $region9
    $region8: #{tpu_custom_call.1} parent=1 // pred_region
      _
    $region9: #{tpu_custom_call.1} parent=1 // pred_fallthru
      _
    // Predicated region
    $region10: #{tpu_custom_call.1} parent=1 // pred_check
      _
    $region11: #{tpu_custom_call.1} parent=1 // pred_check_branch
      %20 = sbr.rel (0) target = $region13
    $region12: #{tpu_custom_call.1} parent=1 // pred_region
      %s22 = ssub.s32 512, 512
      %23 = vsyncadd [#allocation3], %s22
      %s24 = sshll.u32 [#allocation2], 4
      %s25 = int_to_ptr.vmem [resolvable:$true] %s24
      %30 = dma.hbm_to_vmem [thread:$0]  %s2, 512, %s25, [#allocation3], 64, 64, 4
    $region13: #{tpu_custom_call.1} parent=1 // pred_fallthru
      _
    // Predicated region
    $region14: #{tpu_custom_call.1} parent=1 // pred_check
      _
    $region15: #{tpu_custom_call.1} parent=1 // pred_check_branch
      %32 = sbr.rel (0) target = $region17
    $region16: #{tpu_custom_call.1} parent=1 // pred_region
      %s34 = ssub.s32 512, 512
      %35 = vsyncadd [#allocation6], %s34
      %s36 = sshll.u32 [#allocation5], 4
      %s37 = int_to_ptr.vmem [resolvable:$true] %s36
      %42 = dma.hbm_to_vmem [thread:$0]  %s3, 512, %s37, [#allocation6], 64, 64, 4
    $region17: #{tpu_custom_call.1} parent=1 // pred_fallthru
      _
    // Predicated region
    $region18: #{tpu_custom_call.1} parent=1 // pred_check
      _
    $region19: #{tpu_custom_call.1} parent=1 // pred_check_branch
      %44 = sbr.rel (0) target = $region21
    $region20: #{tpu_custom_call.1} parent=1 // pred_region
      _
    $region21: #{tpu_custom_call.1} parent=1 // pred_fallthru
      _
    // Predicated region
    $region22: #{tpu_custom_call.1} parent=1 // pred_check
      _
    $region23: #{tpu_custom_call.1} parent=1 // pred_check_branch
      %46 = sbr.rel (0) target = $region25
    $region24: #{tpu_custom_call.1} parent=1 // pred_region
      %s48 = ssub.s32 2560, 2560
      %49 = vsyncadd [#allocation6], %s48
      %s50 = sshll.u32 [#allocation7], 4
      %s51 = int_to_ptr.vmem [resolvable:$true] %s50
      %56 = dma.hbm_to_vmem [thread:$0]  %s5, 2560, %s51, [#allocation6], 64, 64, 4
    $region25: #{tpu_custom_call.1} parent=1 // pred_fallthru
      _
    // Predicated region
    $region26: #{tpu_custom_call.1} parent=1 // pred_check
      _
    $region27: #{tpu_custom_call.1} parent=1 // pred_check_branch
      %58 = sbr.rel (0) target = $region29
    $region28: #{tpu_custom_call.1} parent=1 // pred_region
      _
    $region29: #{tpu_custom_call.1} parent=1 // pred_fallthru
      _
    // Predicated region
    $region30: #{tpu_custom_call.1} parent=1 // pred_check
      _
    $region31: #{tpu_custom_call.1} parent=1 // pred_check_branch
      %60 = sbr.rel (0) target = $region33
    $region32: #{tpu_custom_call.1} parent=1 // pred_region
      %61 = dma.done [#allocation3], 512
    $region33: #{tpu_custom_call.1} parent=1 // pred_fallthru
      _
    // Predicated region
    $region34: #{tpu_custom_call.1} parent=1 // pred_check
      _
    $region35: #{tpu_custom_call.1} parent=1 // pred_check_branch
      %63 = sbr.rel (0) target = $region37
    $region36: #{tpu_custom_call.1} parent=1 // pred_region
      %64 = dma.done [#allocation6], 512
    $region37: #{tpu_custom_call.1} parent=1 // pred_fallthru
      _
    // Predicated region
    $region38: #{tpu_custom_call.1} parent=1 // pred_check
      _
    $region39: #{tpu_custom_call.1} parent=1 // pred_check_branch
      %66 = sbr.rel (0) target = $region41
    $region40: #{tpu_custom_call.1} parent=1 // pred_region
      %67 = dma.done [#allocation6], 2560
    $region41: #{tpu_custom_call.1} parent=1 // pred_fallthru
      _
    %v69 = vld [vmem:[%s1] sm:$0xff]
    %v70 = vld [vmem:[%s1 + $0x8] sm:$0xff]
    %v71 = vld [vmem:[%s4] sm:$0x3]
    %v72 = vld [vmem:[#allocation2] sm:$0xf]
    %v73 = vld [vmem:[#allocation2 + $0x4] sm:$0xf]
    %v74 = vld [vmem:[#allocation2 + $0x8] sm:$0xf]
    %v75 = vld [vmem:[#allocation2 + $0xc] sm:$0xf]
    %v76 = vpack.c.bf16 %v70, %v69
    %v77 = vlaneseq
    %v78 = vshrl.u32 %v77, 7
    %v79 = vsub.s32 0, %v78
    %v80 = vrot.slane %v71, %v79
    %v85 = vunpack.c.l.b16 %v72
    %v86 = vunpack.c.l.b16 %v73
    %v87 = vunpack.c.l.b16 %v74
    %v88 = vunpack.c.l.b16 %v75
    %v89 = vpack.c.b16 %v86, %v85
    %v90 = vpack.c.b16 %v88, %v87
    %vm93 = vcmask 261120
    %v95 = vsel %vm93, %v76, 0
    %97 = vmatprep.subr.bf16.mxu0 0
    %98 = vmatpush1.bf16.msra.mxu0 0
    %99 = vmatprep.subr.bf16.mxu0 0
    %100 = vmatpush1.bf16.msra.mxu0 0
    %101 = vmatprep.subr.bf16.mxu0 0
    %102 = vmatpush1.bf16.msra.mxu0 0
    %103 = vmatprep.subr.bf16.mxu0 0
    %104 = vmatpush1.bf16.msra.mxu0 0
    %105 = vmatprep.subr.bf16.mxu0 0
    %106 = vmatpush1.bf16.msra.mxu0 0
    %107 = vmatprep.subr.bf16.mxu0 0
    %108 = vmatpush1.bf16.msra.mxu0 0
    %109 = vmatprep.subr.bf16.mxu0 0
    %110 = vmatpush1.bf16.msra.mxu0 %v90
    %111 = vmatprep.subr.bf16.mxu0 0
    %112 = vmatpush1.bf16.msra.mxu0 %v89
    %113 = vmatprep.subr.bf16.mxu0 0
    %114 = vmatpush2.bf16.msra.mxu0 0
    %115 = vmatprep.subr.bf16.mxu0 0
    %116 = vmatpush2.bf16.msra.mxu0 0
    %117 = vmatprep.subr.bf16.mxu0 0
    %118 = vmatpush2.bf16.msra.mxu0 0
    %119 = vmatprep.subr.bf16.mxu0 0
    %120 = vmatpush2.bf16.msra.mxu0 0
    %121 = vmatprep.subr.bf16.mxu0 0
    %122 = vmatpush2.bf16.msra.mxu0 0
    %123 = vmatprep.subr.bf16.mxu0 0
    %124 = vmatpush2.bf16.msra.mxu0 0
    %125 = vmatprep.subr.bf16.mxu0 0
    %126 = vmatpush2.bf16.msra.mxu0 0
    %127 = vmatprep.subr.bf16.mxu0 0
    %128 = vmatpush2.bf16.msra.mxu0 0
    %129 = vmatprep.mubr.bf16.mxu0 0
    %130 = vmatmul.mubr.bf16.gmra.mxu0 %v95
    %v131 = vpop.f32.mrf.mxu0
    %v132 = vadd.f32 %v80, %v131
    %v133 = vpop.f32.mrf.mxu0
    %v134 = vpop.f32.mrf.mxu0
    %v135 = vadd.f32 %v80, %v134
    %v136 = vpop.f32.mrf.mxu0
    %137 = vdwg.mxu0
    %140 = vrot.lane.b32.xlu0 %v132, 96
    %v141 = vpop.permute.xlu0 %140
    %142 = vrot.lane.b32.xlu0 %v135, 96
    %v143 = vpop.permute.xlu0 %142
    %v144 = vsel %vm93, %v132, 0
    %v146 = vsel %vm93, %v135, 0
    %v148 = vsel %vm93, %v141, 0
    %v150 = vsel %vm93, %v143, 0
    %152 = vmatprep.subr.mxu0 0.0
    %153 = vmatpush1.xpose.msra.mxu0 0.0
    %154 = vmatprep.subr.mxu0 0.0
    %155 = vmatpush1.xpose.msra.mxu0 0.0
    %156 = vmatprep.subr.mxu0 0.0
    %157 = vmatpush1.xpose.msra.mxu0 0.0
    %158 = vmatprep.subr.mxu0 0.0
    %159 = vmatpush1.xpose.msra.mxu0 0.0
    %160 = vmatprep.subr.mxu0 0.0
    %161 = vmatpush1.xpose.msra.mxu0 0.0
    %162 = vmatprep.subr.mxu0 0.0
    %163 = vmatpush1.xpose.msra.mxu0 0.0
    %164 = vmatprep.subr.mxu0 0.0
    %165 = vmatpush1.xpose.msra.mxu0 0.0
    %166 = vmatprep.subr.mxu0 0.0
    %167 = vmatpush1.xpose.msra.mxu0 0.0
    %168 = vmatprep.subr.mxu0 0.0
    %169 = vmatpush1.xpose.msra.mxu0 0.0
    %170 = vmatprep.subr.mxu0 0.0
    %171 = vmatpush1.xpose.msra.mxu0 0.0
    %172 = vmatprep.subr.mxu0 0.0
    %173 = vmatpush1.xpose.msra.mxu0 0.0
    %174 = vmatprep.subr.mxu0 0.0
    %175 = vmatpush1.xpose.msra.mxu0 0.0
    %176 = vmatprep.subr.mxu0 0.0
    %177 = vmatpush1.xpose.msra.mxu0 0.0
    %178 = vmatprep.subr.mxu0 0.0
    %179 = vmatpush1.xpose.msra.mxu0 0.0
    %180 = vmatprep.subr.mxu0 0.0
    %181 = vmatpush1.xpose.msra.mxu0 %v150
    %182 = vmatprep.subr.mxu0 0.0
    %183 = vmatpush1.xpose.msra.mxu0 %v148
    %184 = vmatprep.subr.mxu0 0.0
    %185 = vmatpush2.xpose.msra.mxu0 0.0
    %186 = vmatprep.subr.mxu0 0.0
    %187 = vmatpush2.xpose.msra.mxu0 0.0
    %188 = vmatprep.subr.mxu0 0.0
    %189 = vmatpush2.xpose.msra.mxu0 0.0
    %190 = vmatprep.subr.mxu0 0.0
    %191 = vmatpush2.xpose.msra.mxu0 0.0
    %192 = vmatprep.subr.mxu0 0.0
    %193 = vmatpush2.xpose.msra.mxu0 0.0
    %194 = vmatprep.subr.mxu0 0.0
    %195 = vmatpush2.xpose.msra.mxu0 0.0
    %196 = vmatprep.subr.mxu0 0.0
    %197 = vmatpush2.xpose.msra.mxu0 0.0
    %198 = vmatprep.subr.mxu0 0.0
    %199 = vmatpush2.xpose.msra.mxu0 0.0
    %200 = vmatprep.subr.mxu0 0.0
    %201 = vmatpush2.xpose.msra.mxu0 0.0
    %202 = vmatprep.subr.mxu0 0.0
    %203 = vmatpush2.xpose.msra.mxu0 0.0
    %204 = vmatprep.subr.mxu0 0.0
    %205 = vmatpush2.xpose.msra.mxu0 0.0
    %206 = vmatprep.subr.mxu0 0.0
    %207 = vmatpush2.xpose.msra.mxu0 0.0
    %208 = vmatprep.subr.mxu0 0.0
    %209 = vmatpush2.xpose.msra.mxu0 0.0
    %210 = vmatprep.subr.mxu0 0.0
    %211 = vmatpush2.xpose.msra.mxu0 0.0
    %212 = vmatprep.subr.mxu0 0.0
    %213 = vmatpush2.xpose.msra.mxu0 0.0
    %214 = vmatprep.subr.mxu0 0.0
    %215 = vmatpush2.xpose.msra.mxu0 0.0
    %216 = vmatprep.mubr.f32.mxu0 0.0
    %217 = vmatmul.mubr.f32.gmra.mxu0 %v144
    %v218 = vpop.f32.mrf.mxu0
    %v219 = vadd.f32 0.0, %v218
    %v220 = vpop.f32.mrf.mxu0
    %221 = vmatprep.mubr.f32.mxu0 0.0
    %222 = vmatmul.mubr.f32.gmra.mxu0 %v146
    %v223 = vpop.f32.mrf.mxu0
    %v224 = vadd.f32 0.0, %v223
    %v225 = vpop.f32.mrf.mxu0
    %226 = vdwg.mxu0
    %vm227 = vcmask 130048
    %v228 = vsel %vm227, %v219, -inf
    %229 = vmax.xlane.f32.xlu0 %v228
    %v230 = vpop.xlane.xlu0 %229
    %v231 = vsel %vm227, %v224, -inf
    %232 = vmax.xlane.f32.xlu0 %v231
    %v233 = vpop.xlane.xlu0 %232
    %v234 = vsub.f32 %v219, %v230
    %v235 = vsub.f32 %v224, %v233
    %v236 = vmul.f32 %v234, 1.442695
    %v237 = vpow.pop %v236
    %v238 = vmul.f32 %v235, 1.442695
    %v239 = vpow.pop %v238
    %v240 = vsel %vm227, %v237, 0.0
    %241 = vadd.xlane.f32.xlu0 %v240
    %v242 = vpop.xlane.xlu0 %241
    %v243 = vsel %vm227, %v239, 0.0
    %244 = vadd.xlane.f32.xlu0 %v243
    %v245 = vpop.xlane.xlu0 %244
    %v246 = vrcp.pop %v242
    %v247 = vrcp.pop %v245
    %v248 = vmul.f32 %v237, %v246
    %v249 = vmul.f32 %v239, %v247
    %250 = vrot.lane.b32.xlu0 %v132, 64
    %v251 = vpop.permute.xlu0 %250
    %252 = vrot.lane.b32.xlu0 %v135, 64
    %v253 = vpop.permute.xlu0 %252
    %v257 = vsel %vm227, %v248, 0
    %v260 = vsel %vm227, %v249, 0
    %262 = vmatprep.subr.mxu0 0.0
    %263 = vmatpush1.msra.mxu0 0.0
    %264 = vmatprep.subr.mxu0 0.0
    %265 = vmatpush1.msra.mxu0 0.0
    %266 = vmatprep.subr.mxu0 0.0
    %267 = vmatpush1.msra.mxu0 0.0
    %268 = vmatprep.subr.mxu0 0.0
    %269 = vmatpush1.msra.mxu0 0.0
    %270 = vmatprep.subr.mxu0 0.0
    %271 = vmatpush1.msra.mxu0 0.0
    %272 = vmatprep.subr.mxu0 0.0
    %273 = vmatpush1.msra.mxu0 0.0
    %274 = vmatprep.subr.mxu0 0.0
    %275 = vmatpush1.msra.mxu0 0.0
    %276 = vmatprep.subr.mxu0 0.0
    %277 = vmatpush1.msra.mxu0 0.0
    %278 = vmatprep.subr.mxu0 0.0
    %279 = vmatpush1.msra.mxu0 0.0
    %280 = vmatprep.subr.mxu0 0.0
    %281 = vmatpush1.msra.mxu0 0.0
    %282 = vmatprep.subr.mxu0 0.0
    %283 = vmatpush1.msra.mxu0 0.0
    %284 = vmatprep.subr.mxu0 0.0
    %285 = vmatpush1.msra.mxu0 0.0
    %286 = vmatprep.subr.mxu0 0.0
    %287 = vmatpush1.msra.mxu0 0.0
    %288 = vmatprep.subr.mxu0 0.0
    %289 = vmatpush1.msra.mxu0 0.0
    %290 = vmatprep.subr.mxu0 0.0
    %291 = vmatpush1.msra.mxu0 %v253
    %292 = vmatprep.subr.mxu0 0.0
    %293 = vmatpush1.msra.mxu0 %v251
    %294 = vmatprep.subr.mxu0 0.0
    %295 = vmatpush2.msra.mxu0 0.0
    %296 = vmatprep.subr.mxu0 0.0
    %297 = vmatpush2.msra.mxu0 0.0
    %298 = vmatprep.subr.mxu0 0.0
    %299 = vmatpush2.msra.mxu0 0.0
    %300 = vmatprep.subr.mxu0 0.0
    %301 = vmatpush2.msra.mxu0 0.0
    %302 = vmatprep.subr.mxu0 0.0
    %303 = vmatpush2.msra.mxu0 0.0
    %304 = vmatprep.subr.mxu0 0.0
    %305 = vmatpush2.msra.mxu0 0.0
    %306 = vmatprep.subr.mxu0 0.0
    %307 = vmatpush2.msra.mxu0 0.0
    %308 = vmatprep.subr.mxu0 0.0
    %309 = vmatpush2.msra.mxu0 0.0
    %310 = vmatprep.subr.mxu0 0.0
    %311 = vmatpush2.msra.mxu0 0.0
    %312 = vmatprep.subr.mxu0 0.0
    %313 = vmatpush2.msra.mxu0 0.0
    %314 = vmatprep.subr.mxu0 0.0
    %315 = vmatpush2.msra.mxu0 0.0
    %316 = vmatprep.subr.mxu0 0.0
    %317 = vmatpush2.msra.mxu0 0.0
    %318 = vmatprep.subr.mxu0 0.0
    %319 = vmatpush2.msra.mxu0 0.0
    %320 = vmatprep.subr.mxu0 0.0
    %321 = vmatpush2.msra.mxu0 0.0
    %322 = vmatprep.subr.mxu0 0.0
    %323 = vmatpush2.msra.mxu0 0.0
    %324 = vmatprep.subr.mxu0 0.0
    %325 = vmatpush2.msra.mxu0 0.0
    %326 = vmatprep.mubr.f32.mxu0 0.0
    %327 = vmatmul.mubr.f32.gmra.mxu0 %v257
    %v328 = vpop.f32.mrf.mxu0
    %v329 = vadd.f32 0.0, %v328
    %v330 = vpop.f32.mrf.mxu0
    %331 = vmatprep.mubr.f32.mxu0 0.0
    %332 = vmatmul.mubr.f32.gmra.mxu0 %v260
    %v333 = vpop.f32.mrf.mxu0
    %v334 = vadd.f32 0.0, %v333
    %v335 = vpop.f32.mrf.mxu0
    %336 = vdwg.mxu0
    %v337 = vld [vmem:[#allocation5] sm:$0xf]
    %v338 = vld [vmem:[#allocation5 + $0x4] sm:$0xf]
    %v339 = vld [vmem:[#allocation5 + $0x8] sm:$0xf]
    %v340 = vld [vmem:[#allocation5 + $0xc] sm:$0xf]
    %v341 = vpack.c.bf16 %v334, %v329
    %v346 = vunpack.c.l.b16 %v337
    %v347 = vunpack.c.l.b16 %v338
    %v348 = vunpack.c.l.b16 %v339
    %v349 = vunpack.c.l.b16 %v340
    %v350 = vpack.c.b16 %v347, %v346
    %v351 = vpack.c.b16 %v349, %v348
    %355 = vrot.lane.b32.xlu0 %v80, 32
    %v356 = vpop.permute.xlu0 %355
    %v359 = vsel %vm93, %v341, 0
    %361 = vmatprep.subr.bf16.mxu0 0
    %362 = vmatpush1.bf16.msra.mxu0 0
    %363 = vmatprep.subr.bf16.mxu0 0
    %364 = vmatpush1.bf16.msra.mxu0 0
    %365 = vmatprep.subr.bf16.mxu0 0
    %366 = vmatpush1.bf16.msra.mxu0 0
    %367 = vmatprep.subr.bf16.mxu0 0
    %368 = vmatpush1.bf16.msra.mxu0 0
    %369 = vmatprep.subr.bf16.mxu0 0
    %370 = vmatpush1.bf16.msra.mxu0 0
    %371 = vmatprep.subr.bf16.mxu0 0
    %372 = vmatpush1.bf16.msra.mxu0 0
    %373 = vmatprep.subr.bf16.mxu0 0
    %374 = vmatpush1.bf16.msra.mxu0 %v351
    %375 = vmatprep.subr.bf16.mxu0 0
    %376 = vmatpush1.bf16.msra.mxu0 %v350
    %377 = vmatprep.subr.bf16.mxu0 0
    %378 = vmatpush2.bf16.msra.mxu0 0
    %379 = vmatprep.subr.bf16.mxu0 0
    %380 = vmatpush2.bf16.msra.mxu0 0
    %381 = vmatprep.subr.bf16.mxu0 0
    %382 = vmatpush2.bf16.msra.mxu0 0
    %383 = vmatprep.subr.bf16.mxu0 0
    %384 = vmatpush2.bf16.msra.mxu0 0
    %385 = vmatprep.subr.bf16.mxu0 0
    %386 = vmatpush2.bf16.msra.mxu0 0
    %387 = vmatprep.subr.bf16.mxu0 0
    %388 = vmatpush2.bf16.msra.mxu0 0
    %389 = vmatprep.subr.bf16.mxu0 0
    %390 = vmatpush2.bf16.msra.mxu0 0
    %391 = vmatprep.subr.bf16.mxu0 0
    %392 = vmatpush2.bf16.msra.mxu0 0
    %393 = vmatprep.mubr.bf16.mxu0 0
    %394 = vmatmul.mubr.bf16.gmra.mxu0 %v359
    %v395 = vpop.f32.mrf.mxu0
    %v396 = vadd.f32 %v356, %v395
    %v397 = vpop.f32.mrf.mxu0
    %v398 = vpop.f32.mrf.mxu0
    %v399 = vadd.f32 %v356, %v398
    %v400 = vpop.f32.mrf.mxu0
    %401 = vdwg.mxu0
    %v402 = vadd.f32 %v396, %v69
    %v403 = vadd.f32 %v399, %v70
    %v404 = vsel %vm93, %v402, 0.0
    %405 = vadd.xlane.f32.xlu0 %v404
    %v406 = vpop.xlane.xlu0 %405
    %v407 = vsel %vm93, %v403, 0.0
    %408 = vadd.xlane.f32.xlu0 %v407
    %v409 = vpop.xlane.xlu0 %408
    %v410 = vrcp.pop 32.0
    %v411 = vmul.f32 %v406, %v410
    %v412 = vmul.f32 %v409, %v410
    %v413 = vsub.f32 %v402, %v411
    %v414 = vsub.f32 %v403, %v412
    %v415 = vmul.f32 %v413, %v413
    %v416 = vmul.f32 %v414, %v414
    %v417 = vsel %vm93, %v415, 0.0
    %418 = vadd.xlane.f32.xlu0 %v417
    %v419 = vpop.xlane.xlu0 %418
    %v420 = vsel %vm93, %v416, 0.0
    %421 = vadd.xlane.f32.xlu0 %v420
    %v422 = vpop.xlane.xlu0 %421
    %v423 = vmul.f32 %v419, %v410
    %v424 = vmul.f32 %v422, %v410
    %v425 = vadd.f32 %v423, 1e-05
    %v426 = vadd.f32 %v424, 1e-05
    %v427 = vrsqrt.pop %v425
    %v428 = vrsqrt.pop %v426
    %v429 = vmul.f32 %v413, %v427
    %v430 = vmul.f32 %v414, %v428
    %v431 = vlaneseq
    %v432 = vshrl.u32 %v431, 7
    %v433 = vsub.s32 1, %v432
    %v434 = vrot.slane %v71, %v433
    %v435 = vmul.f32 %v429, %v434
    %v436 = vmul.f32 %v430, %v434
    %438 = vrot.lane.b32.xlu0 %v434, 96
    %v439 = vpop.permute.xlu0 %438
    %v441 = vadd.f32 %v435, %v439
    %v442 = vadd.f32 %v436, %v439
    %s443 = scalar_lea.vmem %s4, 2
    %v444 = vld [vmem:[%s443] sm:$0x3]
    %s445 = scalar_lea.vmem [#allocation2], 16
    %v446 = vld [vmem:[%s445] sm:$0xf]
    %v447 = vld [vmem:[%s445 + $0x4] sm:$0xf]
    %v448 = vld [vmem:[%s445 + $0x8] sm:$0xf]
    %v449 = vld [vmem:[%s445 + $0xc] sm:$0xf]
    %v450 = vpack.c.bf16 %v442, %v441
    %v451 = vlaneseq
    %v452 = vshrl.u32 %v451, 7
    %v453 = vsub.s32 0, %v452
    %v454 = vrot.slane %v444, %v453
    %v459 = vunpack.c.l.b16 %v446
    %v460 = vunpack.c.l.b16 %v447
    %v461 = vunpack.c.l.b16 %v448
    %v462 = vunpack.c.l.b16 %v449
    %v463 = vpack.c.b16 %v460, %v459
    %v464 = vpack.c.b16 %v462, %v461
    %v468 = vsel %vm93, %v450, 0
    %470 = vmatprep.subr.bf16.mxu0 0
    %471 = vmatpush1.bf16.msra.mxu0 0
    %472 = vmatprep.subr.bf16.mxu0 0
    %473 = vmatpush1.bf16.msra.mxu0 0
    %474 = vmatprep.subr.bf16.mxu0 0
    %475 = vmatpush1.bf16.msra.mxu0 0
    %476 = vmatprep.subr.bf16.mxu0 0
    %477 = vmatpush1.bf16.msra.mxu0 0
    %478 = vmatprep.subr.bf16.mxu0 0
    %479 = vmatpush1.bf16.msra.mxu0 0
    %480 = vmatprep.subr.bf16.mxu0 0
    %481 = vmatpush1.bf16.msra.mxu0 0
    %482 = vmatprep.subr.bf16.mxu0 0
    %483 = vmatpush1.bf16.msra.mxu0 %v464
    %484 = vmatprep.subr.bf16.mxu0 0
    %485 = vmatpush1.bf16.msra.mxu0 %v463
    %486 = vmatprep.subr.bf16.mxu0 0
    %487 = vmatpush2.bf16.msra.mxu0 0
    %488 = vmatprep.subr.bf16.mxu0 0
    %489 = vmatpush2.bf16.msra.mxu0 0
    %490 = vmatprep.subr.bf16.mxu0 0
    %491 = vmatpush2.bf16.msra.mxu0 0
    %492 = vmatprep.subr.bf16.mxu0 0
    %493 = vmatpush2.bf16.msra.mxu0 0
    %494 = vmatprep.subr.bf16.mxu0 0
    %495 = vmatpush2.bf16.msra.mxu0 0
    %496 = vmatprep.subr.bf16.mxu0 0
    %497 = vmatpush2.bf16.msra.mxu0 0
    %498 = vmatprep.subr.bf16.mxu0 0
    %499 = vmatpush2.bf16.msra.mxu0 0
    %500 = vmatprep.subr.bf16.mxu0 0
    %501 = vmatpush2.bf16.msra.mxu0 0
    %502 = vmatprep.mubr.bf16.mxu0 0
    %503 = vmatmul.mubr.bf16.gmra.mxu0 %v468
    %v504 = vpop.f32.mrf.mxu0
    %v505 = vadd.f32 %v454, %v504
    %v506 = vpop.f32.mrf.mxu0
    %v507 = vpop.f32.mrf.mxu0
    %v508 = vadd.f32 %v454, %v507
    %v509 = vpop.f32.mrf.mxu0
    %510 = vdwg.mxu0
    %513 = vrot.lane.b32.xlu0 %v505, 96
    %v514 = vpop.permute.xlu0 %513
    %515 = vrot.lane.b32.xlu0 %v508, 96
    %v516 = vpop.permute.xlu0 %515
    %v517 = vsel %vm93, %v505, 0
    %v519 = vsel %vm93, %v508, 0
    %v521 = vsel %vm93, %v514, 0
    %v523 = vsel %vm93, %v516, 0
    %525 = vmatprep.subr.mxu0 0.0
    %526 = vmatpush1.xpose.msra.mxu0 0.0
    %527 = vmatprep.subr.mxu0 0.0
    %528 = vmatpush1.xpose.msra.mxu0 0.0
    %529 = vmatprep.subr.mxu0 0.0
    %530 = vmatpush1.xpose.msra.mxu0 0.0
    %531 = vmatprep.subr.mxu0 0.0
    %532 = vmatpush1.xpose.msra.mxu0 0.0
    %533 = vmatprep.subr.mxu0 0.0
    %534 = vmatpush1.xpose.msra.mxu0 0.0
    %535 = vmatprep.subr.mxu0 0.0
    %536 = vmatpush1.xpose.msra.mxu0 0.0
    %537 = vmatprep.subr.mxu0 0.0
    %538 = vmatpush1.xpose.msra.mxu0 0.0
    %539 = vmatprep.subr.mxu0 0.0
    %540 = vmatpush1.xpose.msra.mxu0 0.0
    %541 = vmatprep.subr.mxu0 0.0
    %542 = vmatpush1.xpose.msra.mxu0 0.0
    %543 = vmatprep.subr.mxu0 0.0
    %544 = vmatpush1.xpose.msra.mxu0 0.0
    %545 = vmatprep.subr.mxu0 0.0
    %546 = vmatpush1.xpose.msra.mxu0 0.0
    %547 = vmatprep.subr.mxu0 0.0
    %548 = vmatpush1.xpose.msra.mxu0 0.0
    %549 = vmatprep.subr.mxu0 0.0
    %550 = vmatpush1.xpose.msra.mxu0 0.0
    %551 = vmatprep.subr.mxu0 0.0
    %552 = vmatpush1.xpose.msra.mxu0 0.0
    %553 = vmatprep.subr.mxu0 0.0
    %554 = vmatpush1.xpose.msra.mxu0 %v523
    %555 = vmatprep.subr.mxu0 0.0
    %556 = vmatpush1.xpose.msra.mxu0 %v521
    %557 = vmatprep.subr.mxu0 0.0
    %558 = vmatpush2.xpose.msra.mxu0 0.0
    %559 = vmatprep.subr.mxu0 0.0
    %560 = vmatpush2.xpose.msra.mxu0 0.0
    %561 = vmatprep.subr.mxu0 0.0
    %562 = vmatpush2.xpose.msra.mxu0 0.0
    %563 = vmatprep.subr.mxu0 0.0
    %564 = vmatpush2.xpose.msra.mxu0 0.0
    %565 = vmatprep.subr.mxu0 0.0
    %566 = vmatpush2.xpose.msra.mxu0 0.0
    %567 = vmatprep.subr.mxu0 0.0
    %568 = vmatpush2.xpose.msra.mxu0 0.0
    %569 = vmatprep.subr.mxu0 0.0
    %570 = vmatpush2.xpose.msra.mxu0 0.0
    %571 = vmatprep.subr.mxu0 0.0
    %572 = vmatpush2.xpose.msra.mxu0 0.0
    %573 = vmatprep.subr.mxu0 0.0
    %574 = vmatpush2.xpose.msra.mxu0 0.0
    %575 = vmatprep.subr.mxu0 0.0
    %576 = vmatpush2.xpose.msra.mxu0 0.0
    %577 = vmatprep.subr.mxu0 0.0
    %578 = vmatpush2.xpose.msra.mxu0 0.0
    %579 = vmatprep.subr.mxu0 0.0
    %580 = vmatpush2.xpose.msra.mxu0 0.0
    %581 = vmatprep.subr.mxu0 0.0
    %582 = vmatpush2.xpose.msra.mxu0 0.0
    %583 = vmatprep.subr.mxu0 0.0
    %584 = vmatpush2.xpose.msra.mxu0 0.0
    %585 = vmatprep.subr.mxu0 0.0
    %586 = vmatpush2.xpose.msra.mxu0 0.0
    %587 = vmatprep.subr.mxu0 0.0
    %588 = vmatpush2.xpose.msra.mxu0 0.0
    %589 = vmatprep.mubr.f32.mxu0 0.0
    %590 = vmatmul.mubr.f32.gmra.mxu0 %v517
    %v591 = vpop.f32.mrf.mxu0
    %v592 = vadd.f32 0.0, %v591
    %v593 = vpop.f32.mrf.mxu0
    %594 = vmatprep.mubr.f32.mxu0 0.0
    %595 = vmatmul.mubr.f32.gmra.mxu0 %v519
    %v596 = vpop.f32.mrf.mxu0
    %v597 = vadd.f32 0.0, %v596
    %v598 = vpop.f32.mrf.mxu0
    %599 = vdwg.mxu0
    %v600 = vsel %vm227, %v592, -inf
    %601 = vmax.xlane.f32.xlu0 %v600
    %v602 = vpop.xlane.xlu0 %601
    %v603 = vsel %vm227, %v597, -inf
    %604 = vmax.xlane.f32.xlu0 %v603
    %v605 = vpop.xlane.xlu0 %604
    %v606 = vsub.f32 %v592, %v602
    %v607 = vsub.f32 %v597, %v605
    %v608 = vmul.f32 %v606, 1.442695
    %v609 = vpow.pop %v608
    %v610 = vmul.f32 %v607, 1.442695
    %v611 = vpow.pop %v610
    %v612 = vsel %vm227, %v609, 0.0
    %613 = vadd.xlane.f32.xlu0 %v612
    %v614 = vpop.xlane.xlu0 %613
    %v615 = vsel %vm227, %v611, 0.0
    %616 = vadd.xlane.f32.xlu0 %v615
    %v617 = vpop.xlane.xlu0 %616
    %v618 = vrcp.pop %v614
    %v619 = vrcp.pop %v617
    %v620 = vmul.f32 %v609, %v618
    %v621 = vmul.f32 %v611, %v619
    %622 = vrot.lane.b32.xlu0 %v505, 64
    %v623 = vpop.permute.xlu0 %622
    %624 = vrot.lane.b32.xlu0 %v508, 64
    %v625 = vpop.permute.xlu0 %624
    %v629 = vsel %vm227, %v620, 0
    %v632 = vsel %vm227, %v621, 0
    %634 = vmatprep.subr.mxu0 0.0
    %635 = vmatpush1.msra.mxu0 0.0
    %636 = vmatprep.subr.mxu0 0.0
    %637 = vmatpush1.msra.mxu0 0.0
    %638 = vmatprep.subr.mxu0 0.0
    %639 = vmatpush1.msra.mxu0 0.0
    %640 = vmatprep.subr.mxu0 0.0
    %641 = vmatpush1.msra.mxu0 0.0
    %642 = vmatprep.subr.mxu0 0.0
    %643 = vmatpush1.msra.mxu0 0.0
    %644 = vmatprep.subr.mxu0 0.0
    %645 = vmatpush1.msra.mxu0 0.0
    %646 = vmatprep.subr.mxu0 0.0
    %647 = vmatpush1.msra.mxu0 0.0
    %648 = vmatprep.subr.mxu0 0.0
    %649 = vmatpush1.msra.mxu0 0.0
    %650 = vmatprep.subr.mxu0 0.0
    %651 = vmatpush1.msra.mxu0 0.0
    %652 = vmatprep.subr.mxu0 0.0
    %653 = vmatpush1.msra.mxu0 0.0
    %654 = vmatprep.subr.mxu0 0.0
    %655 = vmatpush1.msra.mxu0 0.0
    %656 = vmatprep.subr.mxu0 0.0
    %657 = vmatpush1.msra.mxu0 0.0
    %658 = vmatprep.subr.mxu0 0.0
    %659 = vmatpush1.msra.mxu0 0.0
    %660 = vmatprep.subr.mxu0 0.0
    %661 = vmatpush1.msra.mxu0 0.0
    %662 = vmatprep.subr.mxu0 0.0
    %663 = vmatpush1.msra.mxu0 %v625
    %664 = vmatprep.subr.mxu0 0.0
    %665 = vmatpush1.msra.mxu0 %v623
    %666 = vmatprep.subr.mxu0 0.0
    %667 = vmatpush2.msra.mxu0 0.0
    %668 = vmatprep.subr.mxu0 0.0
    %669 = vmatpush2.msra.mxu0 0.0
    %670 = vmatprep.subr.mxu0 0.0
    %671 = vmatpush2.msra.mxu0 0.0
    %672 = vmatprep.subr.mxu0 0.0
    %673 = vmatpush2.msra.mxu0 0.0
    %674 = vmatprep.subr.mxu0 0.0
    %675 = vmatpush2.msra.mxu0 0.0
    %676 = vmatprep.subr.mxu0 0.0
    %677 = vmatpush2.msra.mxu0 0.0
    %678 = vmatprep.subr.mxu0 0.0
    %679 = vmatpush2.msra.mxu0 0.0
    %680 = vmatprep.subr.mxu0 0.0
    %681 = vmatpush2.msra.mxu0 0.0
    %682 = vmatprep.subr.mxu0 0.0
    %683 = vmatpush2.msra.mxu0 0.0
    %684 = vmatprep.subr.mxu0 0.0
    %685 = vmatpush2.msra.mxu0 0.0
    %686 = vmatprep.subr.mxu0 0.0
    %687 = vmatpush2.msra.mxu0 0.0
    %688 = vmatprep.subr.mxu0 0.0
    %689 = vmatpush2.msra.mxu0 0.0
    %690 = vmatprep.subr.mxu0 0.0
    %691 = vmatpush2.msra.mxu0 0.0
    %692 = vmatprep.subr.mxu0 0.0
    %693 = vmatpush2.msra.mxu0 0.0
    %694 = vmatprep.subr.mxu0 0.0
    %695 = vmatpush2.msra.mxu0 0.0
    %696 = vmatprep.subr.mxu0 0.0
    %697 = vmatpush2.msra.mxu0 0.0
    %698 = vmatprep.mubr.f32.mxu0 0.0
    %699 = vmatmul.mubr.f32.gmra.mxu0 %v629
    %v700 = vpop.f32.mrf.mxu0
    %v701 = vadd.f32 0.0, %v700
    %v702 = vpop.f32.mrf.mxu0
    %703 = vmatprep.mubr.f32.mxu0 0.0
    %704 = vmatmul.mubr.f32.gmra.mxu0 %v632
    %v705 = vpop.f32.mrf.mxu0
    %v706 = vadd.f32 0.0, %v705
    %v707 = vpop.f32.mrf.mxu0
    %708 = vdwg.mxu0
    %s709 = scalar_lea.vmem [#allocation5], 16
    %v710 = vld [vmem:[%s709] sm:$0xf]
    %v711 = vld [vmem:[%s709 + $0x4] sm:$0xf]
    %v712 = vld [vmem:[%s709 + $0x8] sm:$0xf]
    %v713 = vld [vmem:[%s709 + $0xc] sm:$0xf]
    %v714 = vpack.c.bf16 %v706, %v701
    %v719 = vunpack.c.l.b16 %v710
    %v720 = vunpack.c.l.b16 %v711
    %v721 = vunpack.c.l.b16 %v712
    %v722 = vunpack.c.l.b16 %v713
    %v723 = vpack.c.b16 %v720, %v719
    %v724 = vpack.c.b16 %v722, %v721
    %728 = vrot.lane.b32.xlu0 %v454, 32
    %v729 = vpop.permute.xlu0 %728
    %v732 = vsel %vm93, %v714, 0
    %734 = vmatprep.subr.bf16.mxu0 0
    %735 = vmatpush1.bf16.msra.mxu0 0
    %736 = vmatprep.subr.bf16.mxu0 0
    %737 = vmatpush1.bf16.msra.mxu0 0
    %738 = vmatprep.subr.bf16.mxu0 0
    %739 = vmatpush1.bf16.msra.mxu0 0
    %740 = vmatprep.subr.bf16.mxu0 0
    %741 = vmatpush1.bf16.msra.mxu0 0
    %742 = vmatprep.subr.bf16.mxu0 0
    %743 = vmatpush1.bf16.msra.mxu0 0
    %744 = vmatprep.subr.bf16.mxu0 0
    %745 = vmatpush1.bf16.msra.mxu0 0
    %746 = vmatprep.subr.bf16.mxu0 0
    %747 = vmatpush1.bf16.msra.mxu0 %v724
    %748 = vmatprep.subr.bf16.mxu0 0
    %749 = vmatpush1.bf16.msra.mxu0 %v723
    %750 = vmatprep.subr.bf16.mxu0 0
    %751 = vmatpush2.bf16.msra.mxu0 0
    %752 = vmatprep.subr.bf16.mxu0 0
    %753 = vmatpush2.bf16.msra.mxu0 0
    %754 = vmatprep.subr.bf16.mxu0 0
    %755 = vmatpush2.bf16.msra.mxu0 0
    %756 = vmatprep.subr.bf16.mxu0 0
    %757 = vmatpush2.bf16.msra.mxu0 0
    %758 = vmatprep.subr.bf16.mxu0 0
    %759 = vmatpush2.bf16.msra.mxu0 0
    %760 = vmatprep.subr.bf16.mxu0 0
    %761 = vmatpush2.bf16.msra.mxu0 0
    %762 = vmatprep.subr.bf16.mxu0 0
    %763 = vmatpush2.bf16.msra.mxu0 0
    %764 = vmatprep.subr.bf16.mxu0 0
    %765 = vmatpush2.bf16.msra.mxu0 0
    %766 = vmatprep.mubr.bf16.mxu0 0
    %767 = vmatmul.mubr.bf16.gmra.mxu0 %v732
    %v768 = vpop.f32.mrf.mxu0
    %v769 = vadd.f32 %v729, %v768
    %v770 = vpop.f32.mrf.mxu0
    %v771 = vpop.f32.mrf.mxu0
    %v772 = vadd.f32 %v729, %v771
    %v773 = vpop.f32.mrf.mxu0
    %774 = vdwg.mxu0
    %v775 = vadd.f32 %v769, %v441
    %v776 = vadd.f32 %v772, %v442
    %v777 = vsel %vm93, %v775, 0.0
    %778 = vadd.xlane.f32.xlu0 %v777
    %v779 = vpop.xlane.xlu0 %778
    %v780 = vsel %vm93, %v776, 0.0
    %781 = vadd.xlane.f32.xlu0 %v780
    %v782 = vpop.xlane.xlu0 %781
    %v783 = vmul.f32 %v779, %v410
    %v784 = vmul.f32 %v782, %v410
    %v785 = vsub.f32 %v775, %v783
    %v786 = vsub.f32 %v776, %v784
    %v787 = vmul.f32 %v785, %v785
    %v788 = vmul.f32 %v786, %v786
    %v789 = vsel %vm93, %v787, 0.0
    %790 = vadd.xlane.f32.xlu0 %v789
    %v791 = vpop.xlane.xlu0 %790
    %v792 = vsel %vm93, %v788, 0.0
    %793 = vadd.xlane.f32.xlu0 %v792
    %v794 = vpop.xlane.xlu0 %793
    %v795 = vmul.f32 %v791, %v410
    %v796 = vmul.f32 %v794, %v410
    %v797 = vadd.f32 %v795, 1e-05
    %v798 = vadd.f32 %v796, 1e-05
    %v799 = vrsqrt.pop %v797
    %v800 = vrsqrt.pop %v798
    %v801 = vmul.f32 %v785, %v799
    %v802 = vmul.f32 %v786, %v800
    %v803 = vlaneseq
    %v804 = vshrl.u32 %v803, 7
    %v805 = vsub.s32 1, %v804
    %v806 = vrot.slane %v444, %v805
    %v807 = vmul.f32 %v801, %v806
    %v808 = vmul.f32 %v802, %v806
    %810 = vrot.lane.b32.xlu0 %v806, 96
    %v811 = vpop.permute.xlu0 %810
    %v813 = vadd.f32 %v807, %v811
    %v814 = vadd.f32 %v808, %v811
    %v815 = vld [vmem:[%s0] sm:$0xff]
    %v816 = vld [vmem:[%s0 + $0x8] sm:$0xff]
    %v817 = vld [vmem:[%s0 + $0x10] sm:$0xff]
    %v818 = vlaneseq
    %v819 = vand.u32 %v818, 127
    %820 = vset.pattern.permute.xlu0 0
    %821 = vperm.xlu0 %820, %v815
    %v822 = vpop.permute.xlu0 %821
    %823 = vset.pattern.permute.xlu0 0
    %824 = vperm.xlu0 %823, %v816
    %v825 = vpop.permute.xlu0 %824
    %826 = vset.pattern.permute.xlu0 0
    %827 = vperm.xlu0 %826, %v817
    %v828 = vpop.permute.xlu0 %827
    %vm829 = vcmp.eq.s32.totalorder %v819, %v822
    %vm830 = vcmp.eq.s32.totalorder %v819, %v825
    %vm831 = vcmp.eq.s32.totalorder %v819, %v828
    %v832 = vsel %vm829, 1, 0
    %v833 = vsel %vm830, 1, 0
    %v834 = vsel %vm831, 1, 0
    %v835 = vcvt.s32.f32 %v832
    %v836 = vcvt.s32.f32 %v833
    %v837 = vcvt.s32.f32 %v834
    %838 = vset.pattern.permute.xlu0 1
    %839 = vperm.xlu0 %838, %v815
    %v840 = vpop.permute.xlu0 %839
    %841 = vset.pattern.permute.xlu0 1
    %842 = vperm.xlu0 %841, %v816
    %v843 = vpop.permute.xlu0 %842
    %844 = vset.pattern.permute.xlu0 1
    %845 = vperm.xlu0 %844, %v817
    %v846 = vpop.permute.xlu0 %845
    %vm847 = vcmp.eq.s32.totalorder %v819, %v840
    %vm848 = vcmp.eq.s32.totalorder %v819, %v843
    %vm849 = vcmp.eq.s32.totalorder %v819, %v846
    %v850 = vsel %vm847, 1, 0
    %v851 = vsel %vm848, 1, 0
    %v852 = vsel %vm849, 1, 0
    %v853 = vcvt.s32.f32 %v850
    %v854 = vcvt.s32.f32 %v851
    %v855 = vcvt.s32.f32 %v852
    %v857 = vsel %vm227, %v835, 0
    %v860 = vsel %vm227, %v836, 0
    %v863 = vsel %vm227, %v837, 0
    %865 = vmatprep.subr.mxu0 0.0
    %866 = vmatpush1.msra.mxu0 0.0
    %867 = vmatprep.subr.mxu0 0.0
    %868 = vmatpush1.msra.mxu0 0.0
    %869 = vmatprep.subr.mxu0 0.0
    %870 = vmatpush1.msra.mxu0 0.0
    %871 = vmatprep.subr.mxu0 0.0
    %872 = vmatpush1.msra.mxu0 0.0
    %873 = vmatprep.subr.mxu0 0.0
    %874 = vmatpush1.msra.mxu0 0.0
    %875 = vmatprep.subr.mxu0 0.0
    %876 = vmatpush1.msra.mxu0 0.0
    %877 = vmatprep.subr.mxu0 0.0
    %878 = vmatpush1.msra.mxu0 0.0
    %879 = vmatprep.subr.mxu0 0.0
    %880 = vmatpush1.msra.mxu0 0.0
    %881 = vmatprep.subr.mxu0 0.0
    %882 = vmatpush1.msra.mxu0 0.0
    %883 = vmatprep.subr.mxu0 0.0
    %884 = vmatpush1.msra.mxu0 0.0
    %885 = vmatprep.subr.mxu0 0.0
    %886 = vmatpush1.msra.mxu0 0.0
    %887 = vmatprep.subr.mxu0 0.0
    %888 = vmatpush1.msra.mxu0 0.0
    %889 = vmatprep.subr.mxu0 0.0
    %890 = vmatpush1.msra.mxu0 0.0
    %891 = vmatprep.subr.mxu0 0.0
    %892 = vmatpush1.msra.mxu0 0.0
    %893 = vmatprep.subr.mxu0 0.0
    %894 = vmatpush1.msra.mxu0 %v814
    %895 = vmatprep.subr.mxu0 0.0
    %896 = vmatpush1.msra.mxu0 %v813
    %897 = vmatprep.subr.mxu0 0.0
    %898 = vmatpush2.msra.mxu0 0.0
    %899 = vmatprep.subr.mxu0 0.0
    %900 = vmatpush2.msra.mxu0 0.0
    %901 = vmatprep.subr.mxu0 0.0
    %902 = vmatpush2.msra.mxu0 0.0
    %903 = vmatprep.subr.mxu0 0.0
    %904 = vmatpush2.msra.mxu0 0.0
    %905 = vmatprep.subr.mxu0 0.0
    %906 = vmatpush2.msra.mxu0 0.0
    %907 = vmatprep.subr.mxu0 0.0
    %908 = vmatpush2.msra.mxu0 0.0
    %909 = vmatprep.subr.mxu0 0.0
    %910 = vmatpush2.msra.mxu0 0.0
    %911 = vmatprep.subr.mxu0 0.0
    %912 = vmatpush2.msra.mxu0 0.0
    %913 = vmatprep.subr.mxu0 0.0
    %914 = vmatpush2.msra.mxu0 0.0
    %915 = vmatprep.subr.mxu0 0.0
    %916 = vmatpush2.msra.mxu0 0.0
    %917 = vmatprep.subr.mxu0 0.0
    %918 = vmatpush2.msra.mxu0 0.0
    %919 = vmatprep.subr.mxu0 0.0
    %920 = vmatpush2.msra.mxu0 0.0
    %921 = vmatprep.subr.mxu0 0.0
    %922 = vmatpush2.msra.mxu0 0.0
    %923 = vmatprep.subr.mxu0 0.0
    %924 = vmatpush2.msra.mxu0 0.0
    %925 = vmatprep.subr.mxu0 0.0
    %926 = vmatpush2.msra.mxu0 0.0
    %927 = vmatprep.subr.mxu0 0.0
    %928 = vmatpush2.msra.mxu0 0.0
    %929 = vmatprep.mubr.f32.mxu0 0.0
    %930 = vmatmul.mubr.f32.gmra.mxu0 %v857
    %v931 = vpop.f32.mrf.mxu0
    %v932 = vadd.f32 0.0, %v931
    %v933 = vpop.f32.mrf.mxu0
    %934 = vmatprep.mubr.f32.mxu0 0.0
    %935 = vmatmul.mubr.f32.gmra.mxu0 %v860
    %v936 = vpop.f32.mrf.mxu0
    %v937 = vadd.f32 0.0, %v936
    %v938 = vpop.f32.mrf.mxu0
    %939 = vmatprep.mubr.f32.mxu0 0.0
    %940 = vmatmul.mubr.f32.gmra.mxu0 %v863
    %v941 = vpop.f32.mrf.mxu0
    %v942 = vadd.f32 0.0, %v941
    %v943 = vpop.f32.mrf.mxu0
    %944 = vdwg.mxu0
    %v946 = vsel %vm227, %v853, 0
    %v949 = vsel %vm227, %v854, 0
    %v952 = vsel %vm227, %v855, 0
    %954 = vmatprep.subr.mxu0 0.0
    %955 = vmatpush1.msra.mxu0 0.0
    %956 = vmatprep.subr.mxu0 0.0
    %957 = vmatpush1.msra.mxu0 0.0
    %958 = vmatprep.subr.mxu0 0.0
    %959 = vmatpush1.msra.mxu0 0.0
    %960 = vmatprep.subr.mxu0 0.0
    %961 = vmatpush1.msra.mxu0 0.0
    %962 = vmatprep.subr.mxu0 0.0
    %963 = vmatpush1.msra.mxu0 0.0
    %964 = vmatprep.subr.mxu0 0.0
    %965 = vmatpush1.msra.mxu0 0.0
    %966 = vmatprep.subr.mxu0 0.0
    %967 = vmatpush1.msra.mxu0 0.0
    %968 = vmatprep.subr.mxu0 0.0
    %969 = vmatpush1.msra.mxu0 0.0
    %970 = vmatprep.subr.mxu0 0.0
    %971 = vmatpush1.msra.mxu0 0.0
    %972 = vmatprep.subr.mxu0 0.0
    %973 = vmatpush1.msra.mxu0 0.0
    %974 = vmatprep.subr.mxu0 0.0
    %975 = vmatpush1.msra.mxu0 0.0
    %976 = vmatprep.subr.mxu0 0.0
    %977 = vmatpush1.msra.mxu0 0.0
    %978 = vmatprep.subr.mxu0 0.0
    %979 = vmatpush1.msra.mxu0 0.0
    %980 = vmatprep.subr.mxu0 0.0
    %981 = vmatpush1.msra.mxu0 0.0
    %982 = vmatprep.subr.mxu0 0.0
    %983 = vmatpush1.msra.mxu0 %v814
    %984 = vmatprep.subr.mxu0 0.0
    %985 = vmatpush1.msra.mxu0 %v813
    %986 = vmatprep.subr.mxu0 0.0
    %987 = vmatpush2.msra.mxu0 0.0
    %988 = vmatprep.subr.mxu0 0.0
    %989 = vmatpush2.msra.mxu0 0.0
    %990 = vmatprep.subr.mxu0 0.0
    %991 = vmatpush2.msra.mxu0 0.0
    %992 = vmatprep.subr.mxu0 0.0
    %993 = vmatpush2.msra.mxu0 0.0
    %994 = vmatprep.subr.mxu0 0.0
    %995 = vmatpush2.msra.mxu0 0.0
    %996 = vmatprep.subr.mxu0 0.0
    %997 = vmatpush2.msra.mxu0 0.0
    %998 = vmatprep.subr.mxu0 0.0
    %999 = vmatpush2.msra.mxu0 0.0
    %1000 = vmatprep.subr.mxu0 0.0
    %1001 = vmatpush2.msra.mxu0 0.0
    %1002 = vmatprep.subr.mxu0 0.0
    %1003 = vmatpush2.msra.mxu0 0.0
    %1004 = vmatprep.subr.mxu0 0.0
    %1005 = vmatpush2.msra.mxu0 0.0
    %1006 = vmatprep.subr.mxu0 0.0
    %1007 = vmatpush2.msra.mxu0 0.0
    %1008 = vmatprep.subr.mxu0 0.0
    %1009 = vmatpush2.msra.mxu0 0.0
    %1010 = vmatprep.subr.mxu0 0.0
    %1011 = vmatpush2.msra.mxu0 0.0
    %1012 = vmatprep.subr.mxu0 0.0
    %1013 = vmatpush2.msra.mxu0 0.0
    %1014 = vmatprep.subr.mxu0 0.0
    %1015 = vmatpush2.msra.mxu0 0.0
    %1016 = vmatprep.subr.mxu0 0.0
    %1017 = vmatpush2.msra.mxu0 0.0
    %1018 = vmatprep.mubr.f32.mxu0 0.0
    %1019 = vmatmul.mubr.f32.gmra.mxu0 %v946
    %v1020 = vpop.f32.mrf.mxu0
    %v1021 = vadd.f32 0.0, %v1020
    %v1022 = vpop.f32.mrf.mxu0
    %1023 = vmatprep.mubr.f32.mxu0 0.0
    %1024 = vmatmul.mubr.f32.gmra.mxu0 %v949
    %v1025 = vpop.f32.mrf.mxu0
    %v1026 = vadd.f32 0.0, %v1025
    %v1027 = vpop.f32.mrf.mxu0
    %1028 = vmatprep.mubr.f32.mxu0 0.0
    %1029 = vmatmul.mubr.f32.gmra.mxu0 %v952
    %v1030 = vpop.f32.mrf.mxu0
    %v1031 = vadd.f32 0.0, %v1030
    %v1032 = vpop.f32.mrf.mxu0
    %1033 = vdwg.mxu0
    %1037 = vrot.lane.b32.xlu0 %v1021, 32
    %v1038 = vpop.permute.xlu0 %1037
    %1039 = vrot.lane.b32.xlu0 %v1026, 32
    %v1040 = vpop.permute.xlu0 %1039
    %1041 = vrot.lane.b32.xlu0 %v1031, 32
    %v1042 = vpop.permute.xlu0 %1041
    %v1046 = vsel %vm93, %v932, %v1038
    %v1047 = vsel %vm93, %v937, %v1040
    %v1048 = vsel %vm93, %v942, %v1042
    %v1049 = vld [vmem:[%s6] sm:$0x1f]
    %v1050 = vld [vmem:[#allocation7] sm:$0xf]
    %v1051 = vld [vmem:[#allocation7 + $0x4] sm:$0xf]
    %v1052 = vld [vmem:[#allocation7 + $0x8] sm:$0xf]
    %v1053 = vld [vmem:[#allocation7 + $0xc] sm:$0xf]
    %v1054 = vld [vmem:[#allocation7 + $0x10] sm:$0xf]
    %v1055 = vld [vmem:[#allocation7 + $0x14] sm:$0xf]
    %v1056 = vld [vmem:[#allocation7 + $0x18] sm:$0xf]
    %v1057 = vld [vmem:[#allocation7 + $0x1c] sm:$0xf]
    %v1058 = vpack.c.bf16 %v1047, %v1046
    %v1059 = vpack.c.bf16 %v1048, %v1048
    %v1060 = vlaneseq
    %v1061 = vshrl.u32 %v1060, 7
    %v1062 = vsub.s32 0, %v1061
    %v1063 = vrot.slane %v1049, %v1062
    %v1072 = vunpack.c.l.b16 %v1050
    %v1073 = vunpack.c.l.b16 %v1051
    %v1074 = vunpack.c.l.b16 %v1052
    %v1075 = vunpack.c.l.b16 %v1053
    %v1076 = vunpack.c.l.b16 %v1054
    %v1077 = vunpack.c.l.b16 %v1055
    %v1078 = vunpack.c.l.b16 %v1056
    %v1079 = vunpack.c.l.b16 %v1057
    %v1080 = vpack.c.b16 %v1073, %v1072
    %v1081 = vpack.c.b16 %v1075, %v1074
    %v1082 = vpack.c.b16 %v1077, %v1076
    %v1083 = vpack.c.b16 %v1079, %v1078
    %vm1088 = vcmask 523264
    %v1090 = vsel %vm1088, %v1058, 0
    %v1093 = vsel %vm1088, %v1059, 0
    %1095 = vmatprep.subr.bf16.mxu0 0
    %1096 = vmatpush1.bf16.msra.mxu0 0
    %1097 = vmatprep.subr.bf16.mxu0 0
    %1098 = vmatpush1.bf16.msra.mxu0 0
    %1099 = vmatprep.subr.bf16.mxu0 0
    %1100 = vmatpush1.bf16.msra.mxu0 0
    %1101 = vmatprep.subr.bf16.mxu0 0
    %1102 = vmatpush1.bf16.msra.mxu0 0
    %1103 = vmatprep.subr.bf16.mxu0 0
    %1104 = vmatpush1.bf16.msra.mxu0 %v1083
    %1105 = vmatprep.subr.bf16.mxu0 0
    %1106 = vmatpush1.bf16.msra.mxu0 %v1082
    %1107 = vmatprep.subr.bf16.mxu0 0
    %1108 = vmatpush1.bf16.msra.mxu0 %v1081
    %1109 = vmatprep.subr.bf16.mxu0 0
    %1110 = vmatpush1.bf16.msra.mxu0 %v1080
    %1111 = vmatprep.subr.bf16.mxu0 0
    %1112 = vmatpush2.bf16.msra.mxu0 0
    %1113 = vmatprep.subr.bf16.mxu0 0
    %1114 = vmatpush2.bf16.msra.mxu0 0
    %1115 = vmatprep.subr.bf16.mxu0 0
    %1116 = vmatpush2.bf16.msra.mxu0 0
    %1117 = vmatprep.subr.bf16.mxu0 0
    %1118 = vmatpush2.bf16.msra.mxu0 0
    %1119 = vmatprep.subr.bf16.mxu0 0
    %1120 = vmatpush2.bf16.msra.mxu0 0
    %1121 = vmatprep.subr.bf16.mxu0 0
    %1122 = vmatpush2.bf16.msra.mxu0 0
    %1123 = vmatprep.subr.bf16.mxu0 0
    %1124 = vmatpush2.bf16.msra.mxu0 0
    %1125 = vmatprep.subr.bf16.mxu0 0
    %1126 = vmatpush2.bf16.msra.mxu0 0
    %1127 = vmatprep.mubr.bf16.mxu0 0
    %1128 = vmatmul.mubr.bf16.gmra.mxu0 %v1090
    %v1129 = vpop.f32.mrf.mxu0
    %v1130 = vadd.f32 %v1063, %v1129
    %v1131 = vpop.f32.mrf.mxu0
    %v1132 = vpop.f32.mrf.mxu0
    %v1133 = vadd.f32 %v1063, %v1132
    %v1134 = vpop.f32.mrf.mxu0
    %1135 = vmatprep.mubr.bf16.mxu0 0
    %1136 = vmatmul.mubr.bf16.gmra.mxu0 %v1093
    %v1137 = vpop.f32.mrf.mxu0
    %v1138 = vadd.f32 %v1063, %v1137
    %v1139 = vpop.f32.mrf.mxu0
    %v1140 = vpop.f32.mrf.mxu0
    %v1141 = vpop.f32.mrf.mxu0
    %1142 = vdwg.mxu0
    %v1143 = vmax.f32 %v1130, 0.0
    %v1144 = vmax.f32 %v1133, 0.0
    %v1145 = vmax.f32 %v1138, 0.0
    %s1146 = scalar_lea.vmem [#allocation7], 32
    %v1147 = vld [vmem:[%s1146] sm:$0xf]
    %v1148 = vld [vmem:[%s1146 + $0x4] sm:$0xf]
    %v1149 = vld [vmem:[%s1146 + $0x8] sm:$0xf]
    %v1150 = vld [vmem:[%s1146 + $0xc] sm:$0xf]
    %v1151 = vld [vmem:[%s1146 + $0x10] sm:$0xf]
    %v1152 = vld [vmem:[%s1146 + $0x14] sm:$0xf]
    %v1153 = vld [vmem:[%s1146 + $0x18] sm:$0xf]
    %v1154 = vld [vmem:[%s1146 + $0x1c] sm:$0xf]
    %v1155 = vpack.c.bf16 %v1144, %v1143
    %v1156 = vpack.c.bf16 %v1145, %v1145
    %v1157 = vlaneseq
    %v1158 = vshrl.u32 %v1157, 7
    %v1159 = vsub.s32 1, %v1158
    %v1160 = vrot.slane %v1049, %v1159
    %v1169 = vunpack.c.l.b16 %v1147
    %v1170 = vunpack.c.l.b16 %v1148
    %v1171 = vunpack.c.l.b16 %v1149
    %v1172 = vunpack.c.l.b16 %v1150
    %v1173 = vunpack.c.l.b16 %v1151
    %v1174 = vunpack.c.l.b16 %v1152
    %v1175 = vunpack.c.l.b16 %v1153
    %v1176 = vunpack.c.l.b16 %v1154
    %v1177 = vpack.c.b16 %v1170, %v1169
    %v1178 = vpack.c.b16 %v1172, %v1171
    %v1179 = vpack.c.b16 %v1174, %v1173
    %v1180 = vpack.c.b16 %v1176, %v1175
    %v1186 = vsel %vm1088, %v1155, 0
    %v1189 = vsel %vm1088, %v1156, 0
    %1191 = vmatprep.subr.bf16.mxu0 0
    %1192 = vmatpush1.bf16.msra.mxu0 0
    %1193 = vmatprep.subr.bf16.mxu0 0
    %1194 = vmatpush1.bf16.msra.mxu0 0
    %1195 = vmatprep.subr.bf16.mxu0 0
    %1196 = vmatpush1.bf16.msra.mxu0 0
    %1197 = vmatprep.subr.bf16.mxu0 0
    %1198 = vmatpush1.bf16.msra.mxu0 0
    %1199 = vmatprep.subr.bf16.mxu0 0
    %1200 = vmatpush1.bf16.msra.mxu0 %v1180
    %1201 = vmatprep.subr.bf16.mxu0 0
    %1202 = vmatpush1.bf16.msra.mxu0 %v1179
    %1203 = vmatprep.subr.bf16.mxu0 0
    %1204 = vmatpush1.bf16.msra.mxu0 %v1178
    %1205 = vmatprep.subr.bf16.mxu0 0
    %1206 = vmatpush1.bf16.msra.mxu0 %v1177
    %1207 = vmatprep.subr.bf16.mxu0 0
    %1208 = vmatpush2.bf16.msra.mxu0 0
    %1209 = vmatprep.subr.bf16.mxu0 0
    %1210 = vmatpush2.bf16.msra.mxu0 0
    %1211 = vmatprep.subr.bf16.mxu0 0
    %1212 = vmatpush2.bf16.msra.mxu0 0
    %1213 = vmatprep.subr.bf16.mxu0 0
    %1214 = vmatpush2.bf16.msra.mxu0 0
    %1215 = vmatprep.subr.bf16.mxu0 0
    %1216 = vmatpush2.bf16.msra.mxu0 0
    %1217 = vmatprep.subr.bf16.mxu0 0
    %1218 = vmatpush2.bf16.msra.mxu0 0
    %1219 = vmatprep.subr.bf16.mxu0 0
    %1220 = vmatpush2.bf16.msra.mxu0 0
    %1221 = vmatprep.subr.bf16.mxu0 0
    %1222 = vmatpush2.bf16.msra.mxu0 0
    %1223 = vmatprep.mubr.bf16.mxu0 0
    %1224 = vmatmul.mubr.bf16.gmra.mxu0 %v1186
    %v1225 = vpop.f32.mrf.mxu0
    %v1226 = vadd.f32 %v1160, %v1225
    %v1227 = vpop.f32.mrf.mxu0
    %v1228 = vpop.f32.mrf.mxu0
    %v1229 = vadd.f32 %v1160, %v1228
    %v1230 = vpop.f32.mrf.mxu0
    %1231 = vmatprep.mubr.bf16.mxu0 0
    %1232 = vmatmul.mubr.bf16.gmra.mxu0 %v1189
    %v1233 = vpop.f32.mrf.mxu0
    %v1234 = vadd.f32 %v1160, %v1233
    %v1235 = vpop.f32.mrf.mxu0
    %v1236 = vpop.f32.mrf.mxu0
    %v1237 = vpop.f32.mrf.mxu0
    %1238 = vdwg.mxu0
    %v1239 = vmax.f32 %v1226, 0.0
    %v1240 = vmax.f32 %v1229, 0.0
    %v1241 = vmax.f32 %v1234, 0.0
    %v1242 = vadd.f32 %v1239, %v1046
    %v1243 = vadd.f32 %v1240, %v1047
    %v1244 = vadd.f32 %v1241, %v1048
    %s1245 = scalar_lea.vmem [#allocation7], 64
    %v1246 = vld [vmem:[%s1245] sm:$0xf]
    %v1247 = vld [vmem:[%s1245 + $0x4] sm:$0xf]
    %v1248 = vld [vmem:[%s1245 + $0x8] sm:$0xf]
    %v1249 = vld [vmem:[%s1245 + $0xc] sm:$0xf]
    %v1250 = vld [vmem:[%s1245 + $0x10] sm:$0xf]
    %v1251 = vld [vmem:[%s1245 + $0x14] sm:$0xf]
    %v1252 = vld [vmem:[%s1245 + $0x18] sm:$0xf]
    %v1253 = vld [vmem:[%s1245 + $0x1c] sm:$0xf]
    %v1254 = vpack.c.bf16 %v1243, %v1242
    %v1255 = vpack.c.bf16 %v1244, %v1244
    %v1256 = vlaneseq
    %v1257 = vshrl.u32 %v1256, 7
    %v1258 = vsub.s32 2, %v1257
    %v1259 = vrot.slane %v1049, %v1258
    %v1268 = vunpack.c.l.b16 %v1246
    %v1269 = vunpack.c.l.b16 %v1247
    %v1270 = vunpack.c.l.b16 %v1248
    %v1271 = vunpack.c.l.b16 %v1249
    %v1272 = vunpack.c.l.b16 %v1250
    %v1273 = vunpack.c.l.b16 %v1251
    %v1274 = vunpack.c.l.b16 %v1252
    %v1275 = vunpack.c.l.b16 %v1253
    %v1276 = vpack.c.b16 %v1269, %v1268
    %v1277 = vpack.c.b16 %v1271, %v1270
    %v1278 = vpack.c.b16 %v1273, %v1272
    %v1279 = vpack.c.b16 %v1275, %v1274
    %v1285 = vsel %vm1088, %v1254, 0
    %v1288 = vsel %vm1088, %v1255, 0
    %1290 = vmatprep.subr.bf16.mxu0 0
    %1291 = vmatpush1.bf16.msra.mxu0 0
    %1292 = vmatprep.subr.bf16.mxu0 0
    %1293 = vmatpush1.bf16.msra.mxu0 0
    %1294 = vmatprep.subr.bf16.mxu0 0
    %1295 = vmatpush1.bf16.msra.mxu0 0
    %1296 = vmatprep.subr.bf16.mxu0 0
    %1297 = vmatpush1.bf16.msra.mxu0 0
    %1298 = vmatprep.subr.bf16.mxu0 0
    %1299 = vmatpush1.bf16.msra.mxu0 %v1279
    %1300 = vmatprep.subr.bf16.mxu0 0
    %1301 = vmatpush1.bf16.msra.mxu0 %v1278
    %1302 = vmatprep.subr.bf16.mxu0 0
    %1303 = vmatpush1.bf16.msra.mxu0 %v1277
    %1304 = vmatprep.subr.bf16.mxu0 0
    %1305 = vmatpush1.bf16.msra.mxu0 %v1276
    %1306 = vmatprep.subr.bf16.mxu0 0
    %1307 = vmatpush2.bf16.msra.mxu0 0
    %1308 = vmatprep.subr.bf16.mxu0 0
    %1309 = vmatpush2.bf16.msra.mxu0 0
    %1310 = vmatprep.subr.bf16.mxu0 0
    %1311 = vmatpush2.bf16.msra.mxu0 0
    %1312 = vmatprep.subr.bf16.mxu0 0
    %1313 = vmatpush2.bf16.msra.mxu0 0
    %1314 = vmatprep.subr.bf16.mxu0 0
    %1315 = vmatpush2.bf16.msra.mxu0 0
    %1316 = vmatprep.subr.bf16.mxu0 0
    %1317 = vmatpush2.bf16.msra.mxu0 0
    %1318 = vmatprep.subr.bf16.mxu0 0
    %1319 = vmatpush2.bf16.msra.mxu0 0
    %1320 = vmatprep.subr.bf16.mxu0 0
    %1321 = vmatpush2.bf16.msra.mxu0 0
    %1322 = vmatprep.mubr.bf16.mxu0 0
    %1323 = vmatmul.mubr.bf16.gmra.mxu0 %v1285
    %v1324 = vpop.f32.mrf.mxu0
    %v1325 = vadd.f32 %v1259, %v1324
    %v1326 = vpop.f32.mrf.mxu0
    %v1327 = vpop.f32.mrf.mxu0
    %v1328 = vadd.f32 %v1259, %v1327
    %v1329 = vpop.f32.mrf.mxu0
    %1330 = vmatprep.mubr.bf16.mxu0 0
    %1331 = vmatmul.mubr.bf16.gmra.mxu0 %v1288
    %v1332 = vpop.f32.mrf.mxu0
    %v1333 = vadd.f32 %v1259, %v1332
    %v1334 = vpop.f32.mrf.mxu0
    %v1335 = vpop.f32.mrf.mxu0
    %v1336 = vpop.f32.mrf.mxu0
    %1337 = vdwg.mxu0
    %v1338 = vmax.f32 %v1325, 0.0
    %v1339 = vmax.f32 %v1328, 0.0
    %v1340 = vmax.f32 %v1333, 0.0
    %s1341 = scalar_lea.vmem [#allocation7], 96
    %v1342 = vld [vmem:[%s1341] sm:$0xf]
    %v1343 = vld [vmem:[%s1341 + $0x4] sm:$0xf]
    %v1344 = vld [vmem:[%s1341 + $0x8] sm:$0xf]
    %v1345 = vld [vmem:[%s1341 + $0xc] sm:$0xf]
    %v1346 = vld [vmem:[%s1341 + $0x10] sm:$0xf]
    %v1347 = vld [vmem:[%s1341 + $0x14] sm:$0xf]
    %v1348 = vld [vmem:[%s1341 + $0x18] sm:$0xf]
    %v1349 = vld [vmem:[%s1341 + $0x1c] sm:$0xf]
    %v1350 = vpack.c.bf16 %v1339, %v1338
    %v1351 = vpack.c.bf16 %v1340, %v1340
    %v1352 = vlaneseq
    %v1353 = vshrl.u32 %v1352, 7
    %v1354 = vsub.s32 3, %v1353
    %v1355 = vrot.slane %v1049, %v1354
    %v1364 = vunpack.c.l.b16 %v1342
    %v1365 = vunpack.c.l.b16 %v1343
    %v1366 = vunpack.c.l.b16 %v1344
    %v1367 = vunpack.c.l.b16 %v1345
    %v1368 = vunpack.c.l.b16 %v1346
    %v1369 = vunpack.c.l.b16 %v1347
    %v1370 = vunpack.c.l.b16 %v1348
    %v1371 = vunpack.c.l.b16 %v1349
    %v1372 = vpack.c.b16 %v1365, %v1364
    %v1373 = vpack.c.b16 %v1367, %v1366
    %v1374 = vpack.c.b16 %v1369, %v1368
    %v1375 = vpack.c.b16 %v1371, %v1370
    %v1381 = vsel %vm1088, %v1350, 0
    %v1384 = vsel %vm1088, %v1351, 0
    %1386 = vmatprep.subr.bf16.mxu0 0
    %1387 = vmatpush1.bf16.msra.mxu0 0
    %1388 = vmatprep.subr.bf16.mxu0 0
    %1389 = vmatpush1.bf16.msra.mxu0 0
    %1390 = vmatprep.subr.bf16.mxu0 0
    %1391 = vmatpush1.bf16.msra.mxu0 0
    %1392 = vmatprep.subr.bf16.mxu0 0
    %1393 = vmatpush1.bf16.msra.mxu0 0
    %1394 = vmatprep.subr.bf16.mxu0 0
    %1395 = vmatpush1.bf16.msra.mxu0 %v1375
    %1396 = vmatprep.subr.bf16.mxu0 0
    %1397 = vmatpush1.bf16.msra.mxu0 %v1374
    %1398 = vmatprep.subr.bf16.mxu0 0
    %1399 = vmatpush1.bf16.msra.mxu0 %v1373
    %1400 = vmatprep.subr.bf16.mxu0 0
    %1401 = vmatpush1.bf16.msra.mxu0 %v1372
    %1402 = vmatprep.subr.bf16.mxu0 0
    %1403 = vmatpush2.bf16.msra.mxu0 0
    %1404 = vmatprep.subr.bf16.mxu0 0
    %1405 = vmatpush2.bf16.msra.mxu0 0
    %1406 = vmatprep.subr.bf16.mxu0 0
    %1407 = vmatpush2.bf16.msra.mxu0 0
    %1408 = vmatprep.subr.bf16.mxu0 0
    %1409 = vmatpush2.bf16.msra.mxu0 0
    %1410 = vmatprep.subr.bf16.mxu0 0
    %1411 = vmatpush2.bf16.msra.mxu0 0
    %1412 = vmatprep.subr.bf16.mxu0 0
    %1413 = vmatpush2.bf16.msra.mxu0 0
    %1414 = vmatprep.subr.bf16.mxu0 0
    %1415 = vmatpush2.bf16.msra.mxu0 0
    %1416 = vmatprep.subr.bf16.mxu0 0
    %1417 = vmatpush2.bf16.msra.mxu0 0
    %1418 = vmatprep.mubr.bf16.mxu0 0
    %1419 = vmatmul.mubr.bf16.gmra.mxu0 %v1381
    %v1420 = vpop.f32.mrf.mxu0
    %v1421 = vadd.f32 %v1355, %v1420
    %v1422 = vpop.f32.mrf.mxu0
    %v1423 = vpop.f32.mrf.mxu0
    %v1424 = vadd.f32 %v1355, %v1423
    %v1425 = vpop.f32.mrf.mxu0
    %1426 = vmatprep.mubr.bf16.mxu0 0
    %1427 = vmatmul.mubr.bf16.gmra.mxu0 %v1384
    %v1428 = vpop.f32.mrf.mxu0
    %v1429 = vadd.f32 %v1355, %v1428
    %v1430 = vpop.f32.mrf.mxu0
    %v1431 = vpop.f32.mrf.mxu0
    %v1432 = vpop.f32.mrf.mxu0
    %1433 = vdwg.mxu0
    %v1434 = vmax.f32 %v1421, 0.0
    %v1435 = vmax.f32 %v1424, 0.0
    %v1436 = vmax.f32 %v1429, 0.0
    %v1437 = vadd.f32 %v1434, %v1242
    %v1438 = vadd.f32 %v1435, %v1243
    %v1439 = vadd.f32 %v1436, %v1244
    %s1440 = scalar_lea.vmem [#allocation7], 128
    %v1441 = vld [vmem:[%s1440] sm:$0xf]
    %v1442 = vld [vmem:[%s1440 + $0x4] sm:$0xf]
    %v1443 = vld [vmem:[%s1440 + $0x8] sm:$0xf]
    %v1444 = vld [vmem:[%s1440 + $0xc] sm:$0xf]
    %v1445 = vld [vmem:[%s1440 + $0x10] sm:$0xf]
    %v1446 = vld [vmem:[%s1440 + $0x14] sm:$0xf]
    %v1447 = vld [vmem:[%s1440 + $0x18] sm:$0xf]
    %v1448 = vld [vmem:[%s1440 + $0x1c] sm:$0xf]
    %v1449 = vpack.c.bf16 %v1438, %v1437
    %v1450 = vpack.c.bf16 %v1439, %v1439
    %v1451 = vlaneseq
    %v1452 = vshrl.u32 %v1451, 7
    %v1453 = vsub.s32 4, %v1452
    %v1454 = vrot.slane %v1049, %v1453
    %v1463 = vunpack.c.l.b16 %v1441
    %v1464 = vunpack.c.l.b16 %v1442
    %v1465 = vunpack.c.l.b16 %v1443
    %v1466 = vunpack.c.l.b16 %v1444
    %v1467 = vunpack.c.l.b16 %v1445
    %v1468 = vunpack.c.l.b16 %v1446
    %v1469 = vunpack.c.l.b16 %v1447
    %v1470 = vunpack.c.l.b16 %v1448
    %v1471 = vpack.c.b16 %v1464, %v1463
    %v1472 = vpack.c.b16 %v1466, %v1465
    %v1473 = vpack.c.b16 %v1468, %v1467
    %v1474 = vpack.c.b16 %v1470, %v1469
    %v1480 = vsel %vm1088, %v1449, 0
    %v1483 = vsel %vm1088, %v1450, 0
    %1485 = vmatprep.subr.bf16.mxu0 0
    %1486 = vmatpush1.bf16.msra.mxu0 0
    %1487 = vmatprep.subr.bf16.mxu0 0
    %1488 = vmatpush1.bf16.msra.mxu0 0
    %1489 = vmatprep.subr.bf16.mxu0 0
    %1490 = vmatpush1.bf16.msra.mxu0 0
    %1491 = vmatprep.subr.bf16.mxu0 0
    %1492 = vmatpush1.bf16.msra.mxu0 0
    %1493 = vmatprep.subr.bf16.mxu0 0
    %1494 = vmatpush1.bf16.msra.mxu0 %v1474
    %1495 = vmatprep.subr.bf16.mxu0 0
    %1496 = vmatpush1.bf16.msra.mxu0 %v1473
    %1497 = vmatprep.subr.bf16.mxu0 0
    %1498 = vmatpush1.bf16.msra.mxu0 %v1472
    %1499 = vmatprep.subr.bf16.mxu0 0
    %1500 = vmatpush1.bf16.msra.mxu0 %v1471
    %1501 = vmatprep.subr.bf16.mxu0 0
    %1502 = vmatpush2.bf16.msra.mxu0 0
    %1503 = vmatprep.subr.bf16.mxu0 0
    %1504 = vmatpush2.bf16.msra.mxu0 0
    %1505 = vmatprep.subr.bf16.mxu0 0
    %1506 = vmatpush2.bf16.msra.mxu0 0
    %1507 = vmatprep.subr.bf16.mxu0 0
    %1508 = vmatpush2.bf16.msra.mxu0 0
    %1509 = vmatprep.subr.bf16.mxu0 0
    %1510 = vmatpush2.bf16.msra.mxu0 0
    %1511 = vmatprep.subr.bf16.mxu0 0
    %1512 = vmatpush2.bf16.msra.mxu0 0
    %1513 = vmatprep.subr.bf16.mxu0 0
    %1514 = vmatpush2.bf16.msra.mxu0 0
    %1515 = vmatprep.subr.bf16.mxu0 0
    %1516 = vmatpush2.bf16.msra.mxu0 0
    %1517 = vmatprep.mubr.bf16.mxu0 0
    %1518 = vmatmul.mubr.bf16.gmra.mxu0 %v1480
    %v1519 = vpop.f32.mrf.mxu0
    %v1520 = vadd.f32 %v1454, %v1519
    %v1521 = vpop.f32.mrf.mxu0
    %v1522 = vpop.f32.mrf.mxu0
    %v1523 = vadd.f32 %v1454, %v1522
    %v1524 = vpop.f32.mrf.mxu0
    %1525 = vmatprep.mubr.bf16.mxu0 0
    %1526 = vmatmul.mubr.bf16.gmra.mxu0 %v1483
    %v1527 = vpop.f32.mrf.mxu0
    %v1528 = vadd.f32 %v1454, %v1527
    %v1529 = vpop.f32.mrf.mxu0
    %v1530 = vpop.f32.mrf.mxu0
    %v1531 = vpop.f32.mrf.mxu0
    %1532 = vdwg.mxu0
    %vm1533 = vcmask 31744
    %v1534 = vsel %vm1533, %v1520, -inf
    %1535 = vmax.xlane.f32.xlu0 %v1534
    %v1536 = vpop.xlane.xlu0 %1535
    %v1537 = vsel %vm1533, %v1523, -inf
    %1538 = vmax.xlane.f32.xlu0 %v1537
    %v1539 = vpop.xlane.xlu0 %1538
    %v1540 = vsel %vm1533, %v1528, -inf
    %1541 = vmax.xlane.f32.xlu0 %v1540
    %v1542 = vpop.xlane.xlu0 %1541
    %v1543 = vsub.f32 %v1520, %v1536
    %v1544 = vsub.f32 %v1523, %v1539
    %v1545 = vsub.f32 %v1528, %v1542
    %v1546 = vmul.f32 %v1543, 1.442695
    %v1547 = vpow.pop %v1546
    %v1548 = vmul.f32 %v1544, 1.442695
    %v1549 = vpow.pop %v1548
    %v1550 = vmul.f32 %v1545, 1.442695
    %v1551 = vpow.pop %v1550
    %v1552 = vsel %vm1533, %v1547, 0.0
    %1553 = vadd.xlane.f32.xlu0 %v1552
    %v1554 = vpop.xlane.xlu0 %1553
    %v1555 = vsel %vm1533, %v1549, 0.0
    %1556 = vadd.xlane.f32.xlu0 %v1555
    %v1557 = vpop.xlane.xlu0 %1556
    %v1558 = vsel %vm1533, %v1551, 0.0
    %1559 = vadd.xlane.f32.xlu0 %v1558
    %v1560 = vpop.xlane.xlu0 %1559
    %v1561 = vrcp.pop %v1554
    %v1562 = vmul.f32 %v1547, %v1561
    %v1563 = vrcp.pop %v1557
    %v1564 = vmul.f32 %v1549, %v1563
    %v1565 = vrcp.pop %v1560
    %v1566 = vmul.f32 %v1551, %v1565
    %1570 = vrot.lane.b32.xlu0 %v1562, 127
    %v1571 = vpop.permute.xlu0 %1570
    %1572 = vrot.lane.b32.xlu0 %v1564, 127
    %v1573 = vpop.permute.xlu0 %1572
    %1574 = vrot.lane.b32.xlu0 %v1566, 127
    %v1575 = vpop.permute.xlu0 %1574
    %v1579 = vadd.f32 %v1562, %v1571
    %v1580 = vadd.f32 %v1564, %v1573
    %v1581 = vadd.f32 %v1566, %v1575
    %1582 = vrot.lane.b32.xlu0 %v1562, 126
    %v1583 = vpop.permute.xlu0 %1582
    %1584 = vrot.lane.b32.xlu0 %v1564, 126
    %v1585 = vpop.permute.xlu0 %1584
    %1586 = vrot.lane.b32.xlu0 %v1566, 126
    %v1587 = vpop.permute.xlu0 %1586
    %v1591 = vadd.f32 %v1562, %v1583
    %v1592 = vadd.f32 %v1564, %v1585
    %v1593 = vadd.f32 %v1566, %v1587
    %1595 = vset.pattern.permute.xlu0 2
    %1596 = vperm.xlu0 %1595, %v1579
    %v1597 = vpop.permute.xlu0 %1596
    %1600 = vset.pattern.permute.xlu0 2
    %1601 = vperm.xlu0 %1600, %v1580
    %v1602 = vpop.permute.xlu0 %1601
    %1605 = vset.pattern.permute.xlu0 2
    %1606 = vperm.xlu0 %1605, %v1581
    %v1607 = vpop.permute.xlu0 %1606
    %v1609 = vmul.f32 %v835, %v1597
    %v1610 = vmul.f32 %v836, %v1602
    %v1611 = vmul.f32 %v837, %v1607
    %1613 = vset.pattern.permute.xlu0 1
    %1614 = vperm.xlu0 %1613, %v1591
    %v1615 = vpop.permute.xlu0 %1614
    %1618 = vset.pattern.permute.xlu0 1
    %1619 = vperm.xlu0 %1618, %v1592
    %v1620 = vpop.permute.xlu0 %1619
    %1623 = vset.pattern.permute.xlu0 1
    %1624 = vperm.xlu0 %1623, %v1593
    %v1625 = vpop.permute.xlu0 %1624
    %v1627 = vmul.f32 %v853, %v1615
    %v1628 = vmul.f32 %v854, %v1620
    %v1629 = vmul.f32 %v855, %v1625
    %v1630 = vadd.f32 %v1609, %v1627
    %v1631 = vadd.f32 %v1610, %v1628
    %v1632 = vadd.f32 %v1611, %v1629
    %v1633 = vsel %vm227, %v1630, 0.0
    %v1634 = vsel %vm227, %v1631, 0.0
    %v1635 = vadd.f32 %v1633, %v1634
    %v1636 = vsel %vm227, %v1632, 0.0
    %v1637 = vadd.f32 %v1635, %v1636
    %v1638 = vrot.slane %v1637, 4
    %v1639 = vadd.f32 %v1637, %v1638
    %v1640 = vrot.slane %v1639, 2
    %v1641 = vadd.f32 %v1639, %v1640
    %v1642 = vrot.slane %v1641, 1
    %v1643 = vadd.f32 %v1641, %v1642
    %v1644 = vadd.f32 %v835, %v853
    %v1645 = vadd.f32 %v836, %v854
    %v1646 = vadd.f32 %v837, %v855
    %v1647 = vsel %vm227, %v1644, 0.0
    %v1648 = vsel %vm227, %v1645, 0.0
    %v1649 = vadd.f32 %v1647, %v1648
    %v1650 = vsel %vm227, %v1646, 0.0
    %v1651 = vadd.f32 %v1649, %v1650
    %v1652 = vrot.slane %v1651, 4
    %v1653 = vadd.f32 %v1651, %v1652
    %v1654 = vrot.slane %v1653, 2
    %v1655 = vadd.f32 %v1653, %v1654
    %v1656 = vrot.slane %v1655, 1
    %v1657 = vadd.f32 %v1655, %v1656
    %vm1658 = vcmp.gt.f32.partialorder %v1657, 0.0
    %v1659 = vrcp.pop %v1657
    %v1660 = vmul.f32 %v1643, %v1659
    %v1661 = vsel %vm1658, %v1660, 0.0
    %v1662 = vsel %vm1533, %v1562, 0.0
    %v1663 = vsel %vm1533, %v1564, 0.0
    %v1664 = vsel %vm1533, %v1566, 0.0
    %v1665 = vsel %vm227, %v1661, 0.0
    %vm1666 = vcmask 1040384
    %v1667 = vsel %vm1666, %v1665, 0.0
    %1668 = vst [vmem:[#allocation8] sm:$0xff] %v1662
    %1669 = vst [vmem:[#allocation8 + $0x8] sm:$0xff] %v1663
    %1670 = vst [vmem:[#allocation8 + $0x10] sm:$0xff] %v1664
    %1671 = vst [vmem:[#allocation8 + $0x18] sm:$0xff] %v1667
    // Predicated region
    $region42: #{tpu_custom_call.1} parent=1 // pred_check
      _
    $region43: #{tpu_custom_call.1} parent=1 // pred_check_branch
      %1673 = sbr.rel (0) target = $region45
    $region44: #{tpu_custom_call.1} parent=1 // pred_region
      %s1675 = ssub.s32 512, 512
      %1676 = vsyncadd [#allocation4], %s1675
      %s1677 = sshll.u32 [#allocation8], 4
      %s1678 = int_to_ptr.vmem [resolvable:$true] %s1677
      %1683 = dma.vmem_to_hbm [thread:$0]  %s1678, 512, %s7, [#allocation4], 128, 128, 8
    $region45: #{tpu_custom_call.1} parent=1 // pred_fallthru
      _
    // Predicated region
    $region46: #{tpu_custom_call.1} parent=1 // pred_check
      _
    $region47: #{tpu_custom_call.1} parent=1 // pred_check_branch
      %1685 = sbr.rel (0) target = $region49
    $region48: #{tpu_custom_call.1} parent=1 // pred_region
      %1686 = dma.done [#allocation4], 512
    $region49: #{tpu_custom_call.1} parent=1 // pred_fallthru
      _
    %1687 = vsyncpa [#allocation3], 1
    %1688 = vsyncpa [#allocation6], 1
    %1689 = vsyncpa [#allocation4], 1

</llo_original>
